<compile_context>
chip_gen: v6e
topology: v6e:2x2x1
jax: 0.10.0
libtpu: 0.0.40
codegen_flags: <defaults>
</compile_context>

<pallas_src>
import functools

import jax
import jax.numpy as jnp
from jax.experimental import pallas as pl
from jax.experimental.pallas import tpu as pltpu


def _round_up(x, m):
    return ((x + m - 1) // m) * m


def _vmem_capacity_bytes():
    try:
        cap = int(pltpu.get_tpu_info().vmem_capacity_bytes)
        if cap > 0:
            return cap
    except Exception:
        pass
    return 64 << 20  # conservative default: v7x per-TensorCore VMEM


def _ntxent_kernel(row_ref, col_ref, out_ref, m_ref, l_ref, *,
                   n2, n2p, inv_temp, row_tile, col_tile, cols_resident):
    i = pl.program_id(0)
    j = pl.program_id(1)
    nj = pl.num_programs(1)
    row_base = i * row_tile
    col_base = j * col_tile

    @pl.when(j == 0)
    def _init():
        m_ref[...] = jnp.full(m_ref.shape, -1e30, jnp.float32)
        l_ref[...] = jnp.zeros(l_ref.shape, jnp.float32)

    # Column tile (dp, tn): sliced out of the VMEM-resident slab (resident path),
    # or the streamed block (fallback).
    cols = col_ref[j] if cols_resident else col_ref[0]

    # (TM, TN) block of the similarity matrix.  Natural (TM,K)x(K,TN) matmul on
    # the MXU (columns were pre-transposed in the wrapper); 1/temperature is
    # applied to the f32 accumulator so bf16 operands keep logit precision.
    sim = jax.lax.dot_general(
        row_ref[...], cols,
        dimension_numbers=(((1,), (0,)), ((), ())),
        preferred_element_type=jnp.float32) * inv_temp

    def online_update(s):
        # Online logsumexp in f32.  A transiently fully-masked block row is
        # harmless: while m == -1e30 the spurious exp(0) terms are wiped by
        # alpha = exp(-1e30 - m_real) == 0 as soon as a real block arrives, and
        # every row (including padded rows) sees at least one unmasked column
        # over the full column sweep.
        m_prev = m_ref[...]
        m_new = jnp.maximum(m_prev, jnp.max(s, axis=-1, keepdims=True))
        alpha = jnp.exp(m_prev - m_new)
        p = jnp.exp(s - m_new)
        l_ref[...] = alpha * l_ref[...] + jnp.sum(p, axis=-1, keepdims=True)
        m_ref[...] = m_new

    # Mask gating: only blocks that intersect the self-similarity diagonal or
    # contain padded columns pay for the iota/compare/select work.
    hits_diag = (row_base < col_base + col_tile) & (col_base < row_base + row_tile)
    if n2 < n2p:
        needs_mask = hits_diag | (col_base + col_tile > n2)
    else:
        needs_mask = hits_diag

    @pl.when(needs_mask)
    def _masked():
        r_idx = row_base + jax.lax.broadcasted_iota(
            jnp.int32, (row_tile, col_tile), 0)
        c_idx = col_base + jax.lax.broadcasted_iota(
            jnp.int32, (row_tile, col_tile), 1)
        bad = r_idx == c_idx                       # self-similarity
        if n2 < n2p:
            bad = bad | (c_idx >= n2)              # padded columns
        online_update(jnp.where(bad, jnp.float32(-1e30), sim))

    @pl.when(jnp.logical_not(needs_mask))
    def _unmasked():
        online_update(sim)

    @pl.when(j == nj - 1)
    def _finalize():
        lse = m_ref[...] + jnp.log(l_ref[...])     # (TM, 1)
        if n2 < n2p:
            r_col = row_base + jax.lax.broadcasted_iota(
                jnp.int32, (row_tile, 1), 0)
            lse = jnp.where(r_col < n2, lse, 0.0)  # drop padded rows
        # Lane/sublane-dense store of this row tile's partial logsumexp sum.
        out_ref[...] = jnp.full(out_ref.shape, jnp.sum(lse), jnp.float32)


def _choose_tiling(n2):
    """(n2p, tm, tn): padded 2B, row tile, column tile (tn divides tm)."""
    n2_128 = _round_up(n2, 128)
    # Row tile: as large as possible (streamed-column HBM traffic ~ 1/TM), while
    # keeping >= 2 row tiles whenever the problem allows so the "parallel" row
    # axis feeds both v7x TensorCores.
    tm = min(512, max(128, _round_up((n2_128 + 1) // 2, 128)))
    # Column tile: largest 128-multiple divisor of tm (amortizes the ~0.35us
    # per-step overhead and the online-softmax epilogue); tn | tm keeps a single
    # padded size valid for both tiles.
    tn = 128
    for cand in (512, 384, 256, 128):
        if cand <= tm and tm % cand == 0:
            tn = cand
            break
    n2p = _round_up(n2_128, tm)   # multiple of tm, hence of tn
    return n2p, tm, tn


def ntxent_loss(zis, zjs, *, temperature, use_cosine_similarity,
                mxu_dtype=jnp.bfloat16, cols_resident=None):
    """zis, zjs: (B, D). Returns the scalar NT-Xent loss (float32).

    mxu_dtype: dtype fed to the MXU (default bf16; softmax/mask math stays f32).
    cols_resident: override the automatic "keep the whole column operand resident
    in VMEM" decision (None = auto fit-check against per-generation VMEM).
    """
    assert zis.shape == zjs.shape and zis.ndim == 2
    B, D = zis.shape
    n2 = 2 * B
    inv_temp = 1.0 / float(temperature)

    # representations in torch order, and each row's positive partner:
    #   reps = cat([zjs, zis]);  partner[r] = reps[(r + B) % 2B]
    reps = jnp.concatenate([zjs, zis], axis=0).astype(jnp.float32)
    partner = jnp.concatenate([zis, zjs], axis=0).astype(jnp.float32)

    if use_cosine_similarity:
        # torch.nn.CosineSimilarity clamps the *product* of norms by 1e-8; we
        # clamp each norm (differs only for near-zero-norm vectors).
        # rsqrt form: one EUP rsqrt + one VPU mul instead of sqrt + divide.
        def _normalize(x):
            ssq = jnp.sum(x * x, axis=-1, keepdims=True)
            return x * jax.lax.rsqrt(jnp.maximum(ssq, 1e-16))
        reps = _normalize(reps)
        partner = _normalize(partner)

    # Positive logits: one O(N*D) row-wise dot, fully reduced in f32 here
    # (the kernel never sees a reps_pos stream).
    pos_sum = jnp.sum(reps * partner) * inv_temp

    # Pad to the tile grid; features lane-dense (zero padding changes neither
    # the dot products nor the already-applied normalization).
    n2p, tm, tn = _choose_tiling(n2)
    dp = _round_up(D, 128)
    num_row, num_col = n2p // tm, n2p // tn

    reps_mx = jnp.pad(reps.astype(mxu_dtype), ((0, n2p - n2), (0, dp - D)))
    # Pre-transposed column operand, laid out as (num_col, dp, tn) so each column
    # tile is a natural (K, TN) MXU operand (no in-kernel transpose).
    cols_mx = reps_mx.T.reshape(dp, num_col, tn).transpose(1, 0, 2)

    # VMEM budgeting / residency fit-check.  Leave headroom: v7x has 64 MiB of
    # physical VMEM per TensorCore, v5e/v6e have 128 MiB.
    itemsize = jnp.dtype(mxu_dtype).itemsize
    budget = (_vmem_capacity_bytes() * 3) // 4
    fixed = (2 * tm * dp * itemsize        # double-buffered row tile
             + 8 * tm * tn * 4             # in-kernel (TM, TN) f32 temporaries
             + 2 * (tm * 4) * 2            # running max / sum scratch
             + 2 * 8 * 128 * 4             # output block
             + (4 << 20))                  # Mosaic internal scratch slack
    resident_bytes = 2 * n2p * dp * itemsize   # assume slab is double-buffered
    stream_bytes = 2 * dp * tn * itemsize
    if cols_resident is None:
        cols_resident = fixed + resident_bytes <= budget
    need = fixed + (resident_bytes if cols_resident else stream_bytes)
    vmem_limit = int(min(max(need, 32 << 20), max(budget, 32 << 20)))

    if cols_resident:
        # Full-array block, constant index_map: DMA'd once, stays VMEM-resident.
        col_spec = pl.BlockSpec((num_col, dp, tn), lambda i, j: (0, 0, 0))
    else:
        # Streamed fallback: one (dp, tn) column tile per grid step.
        col_spec = pl.BlockSpec((1, dp, tn), lambda i, j: (j, 0, 0))

    kernel = functools.partial(
        _ntxent_kernel, n2=n2, n2p=n2p, inv_temp=inv_temp,
        row_tile=tm, col_tile=tn, cols_resident=bool(cols_resident))

    out = pl.pallas_call(
        kernel,
        out_shape=jax.ShapeDtypeStruct((num_row, 8, 128), jnp.float32),
        grid_spec=pltpu.PrefetchScalarGridSpec(
            num_scalar_prefetch=0,
            grid=(num_row, num_col),
            in_specs=[pl.BlockSpec((tm, dp), lambda i, j: (i, 0)),  # row tile
                      col_spec],                                    # columns
            out_specs=pl.BlockSpec((1, 8, 128), lambda i, j: (i, 0, 0)),
            scratch_shapes=[pltpu.VMEM((tm, 1), jnp.float32),   # running max
                            pltpu.VMEM((tm, 1), jnp.float32)],  # running sum
        ),
        compiler_params=pltpu.CompilerParams(
            dimension_semantics=("parallel", "arbitrary"),
            vmem_limit_bytes=vmem_limit),
    )(reps_mx, cols_mx)

    lse_sum = jnp.sum(out[:, 0, 0])
    return (lse_sum - pos_sum) / jnp.float32(n2)


def _ntxent_reference(zis, zjs, *, temperature, use_cosine_similarity):
    """Plain-JAX reference mirroring the PyTorch module."""
    B = zis.shape[0]
    reps = jnp.concatenate([zjs, zis], axis=0).astype(jnp.float32)
    if use_cosine_similarity:
        norm = jnp.maximum(jnp.linalg.norm(reps, axis=-1, keepdims=True), 1e-8)
        repn = reps / norm
    else:
        repn = reps
    sim = jnp.matmul(repn, repn.T, precision=jax.lax.Precision.HIGHEST)
    n2 = 2 * B
    l_pos = jnp.diagonal(sim, B)
    r_pos = jnp.diagonal(sim, -B)
    positives = jnp.concatenate([l_pos, r_pos]).reshape(-1, 1)
    mask = ~(jnp.eye(n2, dtype=bool)
             | jnp.eye(n2, k=B, dtype=bool)
             | jnp.eye(n2, k=-B, dtype=bool))
    negatives = sim[mask].reshape(n2, -1)
    logits = jnp.concatenate([positives, negatives], axis=1) / temperature
    loss = jnp.sum(jax.nn.logsumexp(logits, axis=-1) - logits[:, 0])
    return loss / n2


if __name__ == "__main__":
    key = jax.random.PRNGKey(0)

    # Case 1: small, cosine similarity, strict f32 MXU path (single tile).
    k1, k2 = jax.random.split(key)
    zis = jax.random.normal(k1, (8, 32), dtype=jnp.float32)
    zjs = jax.random.normal(k2, (8, 32), dtype=jnp.float32)
    ref1 = _ntxent_reference(zis, zjs, temperature=0.5, use_cosine_similarity=True)
    got1 = jax.block_until_ready(
        ntxent_loss(zis, zjs, temperature=0.5, use_cosine_similarity=True,
                    mxu_dtype=jnp.float32))
    assert jnp.allclose(got1, ref1, atol=1e-3, rtol=1e-3), (got1, ref1)

    # Case 2: multiple row/column tiles + row/column padding, dot similarity.
    k3, k4 = jax.random.split(k1)
    zis2 = 0.1 * jax.random.normal(k3, (136, 40), dtype=jnp.float32)
    zjs2 = 0.1 * jax.random.normal(k4, (136, 40), dtype=jnp.float32)
    ref2 = _ntxent_reference(zis2, zjs2, temperature=0.7,
                             use_cosine_similarity=False)
    got2 = jax.block_until_ready(
        ntxent_loss(zis2, zjs2, temperature=0.7, use_cosine_similarity=False,
                    mxu_dtype=jnp.float32))
    assert jnp.allclose(got2, ref2, atol=1e-3, rtol=1e-3), (got2, ref2)

    # Case 3: default bf16 MXU path (v5e/v6e/v7x fast path), looser tolerance.
    got3 = jax.block_until_ready(
        ntxent_loss(zis, zjs, temperature=0.5, use_cosine_similarity=True))
    assert jnp.allclose(got3, ref1, atol=5e-2, rtol=5e-2), (got3, ref1)

    # Case 4: force the streamed-column fallback path (non-resident columns).
    got4 = jax.block_until_ready(
        ntxent_loss(zis2, zjs2, temperature=0.7, use_cosine_similarity=False,
                    mxu_dtype=jnp.float32, cols_resident=False))
    assert jnp.allclose(got4, ref2, atol=1e-3, rtol=1e-3), (got4, ref2)

    print("KERNEL_OK")
</pallas_src>

<mosaic_0001>
module attributes {stable_mosaic.version = 11 : i64} {
  func.func @_ntxent_kernel(%arg0: i32, %arg1: i32, %arg2: memref<128x128xf32, #tpu.memory_space<vmem>>, %arg3: memref<1x128x128xf32, #tpu.memory_space<vmem>>, %arg4: memref<1x8x128xf32, #tpu.memory_space<vmem>>, %arg5: memref<128x1xf32, #tpu.memory_space<vmem>>, %arg6: memref<128x1xf32, #tpu.memory_space<vmem>>) attributes {dimension_semantics = [#tpu.dimension_semantics<parallel>, #tpu.dimension_semantics<arbitrary>], iteration_bounds = array<i64: 1, 1>, scalar_prefetch = 0 : i64, scratch_operands = 2 : i64, tpu.core_type = #tpu.core_type<tc>, window_params = [{transform_indices = @transform_0, window_bounds = array<i64: 128, 128>}, {pipeline_mode = #tpu.pipeline_mode<synchronous>, transform_indices = @transform_1, window_bounds = array<i64: 1, 128, 128>}, {transform_indices = @transform_2, window_bounds = array<i64: 1, 8, 128>}]} {
    %c128_i32 = arith.constant 128 : i32
    %0 = arith.muli %arg0, %c128_i32 : i32
    %c128_i32_0 = arith.constant 128 : i32
    %1 = arith.muli %arg1, %c128_i32_0 : i32
    %c0_i32 = arith.constant 0 : i32
    %2 = arith.cmpi eq, %arg1, %c0_i32 : i32
    %3 = arith.extui %2 : i1 to i32
    %c0_i32_1 = arith.constant 0 : i32
    %4 = arith.cmpi ne, %3, %c0_i32_1 : i32
    scf.if %4 {
      %cst_13 = arith.constant -1.000000e+30 : f32
      %28 = vector.broadcast %cst_13 : f32 to vector<128x1xf32>
      %c0_14 = arith.constant 0 : index
      %c0_15 = arith.constant 0 : index
      %29 = vector.load %arg5[%c0_14, %c0_15] : memref<128x1xf32, #tpu.memory_space<vmem>>, vector<128x1xf32>
      tpu.vector_store %arg5[%c0_14, %c0_15], %28 {strides = array<i32>} : memref<128x1xf32, #tpu.memory_space<vmem>>, vector<128x1xf32>,
      %cst_16 = arith.constant 0.000000e+00 : f32
      %30 = vector.broadcast %cst_16 : f32 to vector<128x1xf32>
      %c0_17 = arith.constant 0 : index
      %c0_18 = arith.constant 0 : index
      %31 = vector.load %arg6[%c0_17, %c0_18] : memref<128x1xf32, #tpu.memory_space<vmem>>, vector<128x1xf32>
      tpu.vector_store %arg6[%c0_17, %c0_18], %30 {strides = array<i32>} : memref<128x1xf32, #tpu.memory_space<vmem>>, vector<128x1xf32>,
    } else {
    }
    %5 = arith.index_cast %arg1 : i32 to index
    %c0 = arith.constant 0 : index
    %c0_2 = arith.constant 0 : index
    %6 = vector.load %arg3[%5, %c0, %c0_2] : memref<1x128x128xf32, #tpu.memory_space<vmem>>, vector<1x128x128xf32>
    %7 = vector.shape_cast %6 : vector<1x128x128xf32> to vector<128x128xf32>
    %c0_3 = arith.constant 0 : index
    %c0_4 = arith.constant 0 : index
    %8 = vector.load %arg2[%c0_3, %c0_4] : memref<128x128xf32, #tpu.memory_space<vmem>>, vector<128x128xf32>
    %cst = arith.constant dense<0.000000e+00> : vector<128x128xf32>
    %9 = tpu.matmul %8, %7, %cst {dimension_numbers = #tpu.dot_dimension_numbers<[1], [0], [0], [1], [0, 0, 1, 1], [], []>} : vector<128x128xf32>, vector<128x128xf32>, vector<128x128xf32> -> vector<128x128xf32>
    %cst_5 = arith.constant 2.000000e+00 : f32
    %10 = vector.broadcast %cst_5 : f32 to vector<128x128xf32>
    %11 = arith.mulf %9, %10 : vector<128x128xf32>
    %c128_i32_6 = arith.constant 128 : i32
    %12 = arith.addi %1, %c128_i32_6 : i32
    %13 = arith.cmpi slt, %0, %12 : i32
    %c128_i32_7 = arith.constant 128 : i32
    %14 = arith.addi %0, %c128_i32_7 : i32
    %15 = arith.cmpi slt, %1, %14 : i32
    %16 = arith.andi %13, %15 : i1
    %c128_i32_8 = arith.constant 128 : i32
    %17 = arith.addi %1, %c128_i32_8 : i32
    %c16_i32 = arith.constant 16 : i32
    %18 = arith.cmpi sgt, %17, %c16_i32 : i32
    %19 = arith.ori %16, %18 : i1
    %20 = arith.extui %19 : i1 to i32
    %c0_i32_9 = arith.constant 0 : i32
    %21 = arith.cmpi ne, %20, %c0_i32_9 : i32
    scf.if %21 {
      %28 = tpu.iota {dimensions = array<i32: 0>} : vector<128x128xi32>
      %29 = vector.broadcast %0 : i32 to vector<128x128xi32>
      %30 = arith.addi %29, %28 : vector<128x128xi32>
      %31 = tpu.iota {dimensions = array<i32: 1>} : vector<128x128xi32>
      %32 = vector.broadcast %1 : i32 to vector<128x128xi32>
      %33 = arith.addi %32, %31 : vector<128x128xi32>
      %34 = arith.cmpi eq, %30, %33 : vector<128x128xi32>
      %c16_i32_13 = arith.constant 16 : i32
      %35 = vector.broadcast %c16_i32_13 : i32 to vector<128x128xi32>
      %36 = arith.cmpi sge, %33, %35 : vector<128x128xi32>
      %37 = arith.ori %34, %36 : vector<128x128xi1>
      %cst_14 = arith.constant -1.000000e+30 : f32
      %38 = vector.broadcast %cst_14 : f32 to vector<128x128xf32>
      %39 = arith.select %37, %38, %11 : vector<128x128xi1>, vector<128x128xf32>
      %c0_15 = arith.constant 0 : index
      %c0_16 = arith.constant 0 : index
      %40 = vector.load %arg5[%c0_15, %c0_16] : memref<128x1xf32, #tpu.memory_space<vmem>>, vector<128x1xf32>
      %cst_17 = arith.constant dense<0xFF800000> : vector<128xf32>
      %41 = vector.multi_reduction <maximumf>, %39, %cst_17 [1] : vector<128x128xf32> to vector<128xf32>
      %42 = vector.shape_cast %41 : vector<128xf32> to vector<128x1xf32>
      %43 = arith.maximumf %40, %42 : vector<128x1xf32>
      %44 = arith.subf %40, %43 : vector<128x1xf32>
      %45 = math.exp %44 : vector<128x1xf32>
      %46 = vector.broadcast %43 : vector<128x1xf32> to vector<128x128xf32>
      %47 = arith.subf %39, %46 : vector<128x128xf32>
      %48 = math.exp %47 : vector<128x128xf32>
      %c0_18 = arith.constant 0 : index
      %c0_19 = arith.constant 0 : index
      %49 = vector.load %arg6[%c0_18, %c0_19] : memref<128x1xf32, #tpu.memory_space<vmem>>, vector<128x1xf32>
      %50 = arith.mulf %45, %49 : vector<128x1xf32>
      %cst_20 = arith.constant dense<0.000000e+00> : vector<128xf32>
      %51 = vector.multi_reduction <add>, %48, %cst_20 [1] : vector<128x128xf32> to vector<128xf32>
      %52 = vector.shape_cast %51 : vector<128xf32> to vector<128x1xf32>
      %53 = arith.addf %50, %52 : vector<128x1xf32>
      %c0_21 = arith.constant 0 : index
      %c0_22 = arith.constant 0 : index
      %54 = vector.load %arg6[%c0_21, %c0_22] : memref<128x1xf32, #tpu.memory_space<vmem>>, vector<128x1xf32>
      tpu.vector_store %arg6[%c0_21, %c0_22], %53 {strides = array<i32>} : memref<128x1xf32, #tpu.memory_space<vmem>>, vector<128x1xf32>,
      %c0_23 = arith.constant 0 : index
      %c0_24 = arith.constant 0 : index
      %55 = vector.load %arg5[%c0_23, %c0_24] : memref<128x1xf32, #tpu.memory_space<vmem>>, vector<128x1xf32>
      tpu.vector_store %arg5[%c0_23, %c0_24], %43 {strides = array<i32>} : memref<128x1xf32, #tpu.memory_space<vmem>>, vector<128x1xf32>,
    } else {
    }
    %true = arith.constant true
    %22 = arith.xori %19, %true : i1
    %23 = arith.extui %22 : i1 to i32
    %c0_i32_10 = arith.constant 0 : i32
    %24 = arith.cmpi ne, %23, %c0_i32_10 : i32
    scf.if %24 {
      %c0_13 = arith.constant 0 : index
      %c0_14 = arith.constant 0 : index
      %28 = vector.load %arg5[%c0_13, %c0_14] : memref<128x1xf32, #tpu.memory_space<vmem>>, vector<128x1xf32>
      %cst_15 = arith.constant dense<0xFF800000> : vector<128xf32>
      %29 = vector.multi_reduction <maximumf>, %11, %cst_15 [1] : vector<128x128xf32> to vector<128xf32>
      %30 = vector.shape_cast %29 : vector<128xf32> to vector<128x1xf32>
      %31 = arith.maximumf %28, %30 : vector<128x1xf32>
      %32 = arith.subf %28, %31 : vector<128x1xf32>
      %33 = math.exp %32 : vector<128x1xf32>
      %34 = vector.broadcast %31 : vector<128x1xf32> to vector<128x128xf32>
      %35 = arith.subf %11, %34 : vector<128x128xf32>
      %36 = math.exp %35 : vector<128x128xf32>
      %c0_16 = arith.constant 0 : index
      %c0_17 = arith.constant 0 : index
      %37 = vector.load %arg6[%c0_16, %c0_17] : memref<128x1xf32, #tpu.memory_space<vmem>>, vector<128x1xf32>
      %38 = arith.mulf %33, %37 : vector<128x1xf32>
      %cst_18 = arith.constant dense<0.000000e+00> : vector<128xf32>
      %39 = vector.multi_reduction <add>, %36, %cst_18 [1] : vector<128x128xf32> to vector<128xf32>
      %40 = vector.shape_cast %39 : vector<128xf32> to vector<128x1xf32>
      %41 = arith.addf %38, %40 : vector<128x1xf32>
      %c0_19 = arith.constant 0 : index
      %c0_20 = arith.constant 0 : index
      %42 = vector.load %arg6[%c0_19, %c0_20] : memref<128x1xf32, #tpu.memory_space<vmem>>, vector<128x1xf32>
      tpu.vector_store %arg6[%c0_19, %c0_20], %41 {strides = array<i32>} : memref<128x1xf32, #tpu.memory_space<vmem>>, vector<128x1xf32>,
      %c0_21 = arith.constant 0 : index
      %c0_22 = arith.constant 0 : index
      %43 = vector.load %arg5[%c0_21, %c0_22] : memref<128x1xf32, #tpu.memory_space<vmem>>, vector<128x1xf32>
      tpu.vector_store %arg5[%c0_21, %c0_22], %31 {strides = array<i32>} : memref<128x1xf32, #tpu.memory_space<vmem>>, vector<128x1xf32>,
    } else {
    }
    %c0_i32_11 = arith.constant 0 : i32
    %25 = arith.cmpi eq, %arg1, %c0_i32_11 : i32
    %26 = arith.extui %25 : i1 to i32
    %c0_i32_12 = arith.constant 0 : i32
    %27 = arith.cmpi ne, %26, %c0_i32_12 : i32
    scf.if %27 {
      %c0_13 = arith.constant 0 : index
      %c0_14 = arith.constant 0 : index
      %28 = vector.load %arg5[%c0_13, %c0_14] : memref<128x1xf32, #tpu.memory_space<vmem>>, vector<128x1xf32>
      %c0_15 = arith.constant 0 : index
      %c0_16 = arith.constant 0 : index
      %29 = vector.load %arg6[%c0_15, %c0_16] : memref<128x1xf32, #tpu.memory_space<vmem>>, vector<128x1xf32>
      %30 = math.log %29 : vector<128x1xf32>
      %31 = arith.addf %28, %30 : vector<128x1xf32>
      %32 = tpu.iota {dimensions = array<i32: 0>} : vector<128x1xi32>
      %33 = vector.broadcast %0 : i32 to vector<128x1xi32>
      %34 = arith.addi %33, %32 : vector<128x1xi32>
      %c16_i32_17 = arith.constant 16 : i32
      %35 = vector.broadcast %c16_i32_17 : i32 to vector<128x1xi32>
      %36 = arith.cmpi slt, %34, %35 : vector<128x1xi32>
      %cst_18 = arith.constant 0.000000e+00 : f32
      %37 = vector.broadcast %cst_18 : f32 to vector<128x1xf32>
      %38 = arith.select %36, %31, %37 : vector<128x1xi1>, vector<128x1xf32>
      %39 = vector.shape_cast %38 : vector<128x1xf32> to vector<1x128x1xf32>
      %cst_19 = arith.constant dense<0.000000e+00> : vector<1xf32>
      %40 = vector.multi_reduction <add>, %39, %cst_19 [1, 2] : vector<1x128x1xf32> to vector<1xf32>
      %41 = vector.shape_cast %40 : vector<1xf32> to vector<1x1x1xf32>
      %42 = vector.extract %41[0, 0, 0] : f32 from vector<1x1x1xf32>
      %43 = vector.broadcast %42 : f32 to vector<1x8x128xf32>
      %c0_20 = arith.constant 0 : index
      %c0_21 = arith.constant 0 : index
      %c0_22 = arith.constant 0 : index
      %44 = vector.load %arg4[%c0_20, %c0_21, %c0_22] : memref<1x8x128xf32, #tpu.memory_space<vmem>>, vector<1x8x128xf32>
      tpu.vector_store %arg4[%c0_20, %c0_21, %c0_22], %43 {strides = array<i32>} : memref<1x8x128xf32, #tpu.memory_space<vmem>>, vector<1x8x128xf32>,
    } else {
    }
    return
  }
  func.func @transform_0(%arg0: i32, %arg1: i32) -> (i32, i32) {
    %c0_i32 = arith.constant 0 : i32
    %c0_i32_0 = arith.constant 0 : i32
    return %arg0, %c0_i32 : i32, i32
  }
  func.func @transform_1(%arg0: i32, %arg1: i32) -> (i32, i32, i32) {
    %c0_i32 = arith.constant 0 : i32
    %c0_i32_0 = arith.constant 0 : i32
    %c0_i32_1 = arith.constant 0 : i32
    %c0_i32_2 = arith.constant 0 : i32
    return %c0_i32, %c0_i32_0, %c0_i32_1 : i32, i32, i32
  }
  func.func @transform_2(%arg0: i32, %arg1: i32) -> (i32, i32, i32) {
    %c0_i32 = arith.constant 0 : i32
    %c0_i32_0 = arith.constant 0 : i32
    %c0_i32_1 = arith.constant 0 : i32
    return %arg0, %c0_i32, %c0_i32_0 : i32, i32, i32
  }
}

</mosaic_0001>

<llo_original>
// kernel: tpu_custom_call.1
$region0: #{tpu_custom_call.1}
  #allocation0 [shape = 'u32[]', space=smem, size = 0x4, offset = 0x4, fixed_abs, tag = 'smem constant byte address 0x4 - core index']
  #allocation1 [shape = 'u32[144,128]{1,0:T(1,128)}', space=vmem, size = 0x12000, scoped, tag = 'internal scratch']
  #allocation2 [shape = 'f32[128,1]{1,0:T(8,128)}', space=vmem, size = 0x10000, scoped, tag = 'scratch operand']
  #allocation3 [shape = 'f32[128,1]{1,0:T(8,128)}', space=vmem, size = 0x10000, scoped, tag = 'scratch operand']
  %s0 = inlined_call_operand.hbm [shape: f32[128,128], index: 0, kind: input, shape index: {}]
  %s1 = inlined_call_operand.hbm [shape: f32[1,128,128], index: 1, kind: input, shape index: {}]
  %s2 = inlined_call_operand.hbm [shape: f32[1,8,128], index: 2, kind: output, shape index: {}]
  %s3 = sld [smem:[#allocation0]]
  $region42: #{tpu_custom_call.1} parent=0
    _
  %s5 = ssub.s32 1, %s3
  %s6 = scalar_select 0, %s5, %s3
  $region1: #{tpu_custom_call.1} parent=0
    #allocation4 [shape = 'u8[65536]{0}', space=vmem, size = 0x10000, scoped, tag = 'input window, operand 0, single buffered']
    #allocation5 [shape = 's32[1]{0}', space=sflag, size = 0x4, scoped, tag = 'scoped memory for tpu_custom_call.1']
    #allocation6 [shape = 's32[1]{0}', space=sflag, size = 0x4, scoped, tag = 'scoped memory for tpu_custom_call.1']
    #allocation7 [shape = 'u8[65536]{0}', space=vmem, size = 0x10000, scoped, tag = 'input window, operand 1, single buffered']
    #allocation8 [shape = 's32[1]{0}', space=sflag, size = 0x4, scoped, tag = 'scoped memory for tpu_custom_call.1']
    #allocation9 [shape = 'u8[4096]{0}', space=vmem, size = 0x1000, scoped, tag = 'output window, operand 0, single buffered']
    %7 = vsyncpa [#allocation5], 0
    %8 = vsyncpa [#allocation8], 0
    %9 = vsyncpa [#allocation6], 0
    // Predicated region
    $region2: #{tpu_custom_call.1} parent=1 // pred_check
      _
    $region3: #{tpu_custom_call.1} parent=1 // pred_check_branch
      %11 = sbr.rel (0) target = $region5
    $region4: #{tpu_custom_call.1} parent=1 // pred_region
      %s13 = ssub.s32 2048, 2048
      %14 = vsyncadd [#allocation5], %s13
      %s15 = sshll.u32 [#allocation4], 4
      %s16 = int_to_ptr.vmem [resolvable:$true] %s15
      %21 = dma.hbm_to_vmem [thread:$0]  %s0, 2048, %s16, [#allocation5], 128, 128, 8
    $region5: #{tpu_custom_call.1} parent=1 // pred_fallthru
      _
    // Predicated region
    $region6: #{tpu_custom_call.1} parent=1 // pred_check
      _
    $region7: #{tpu_custom_call.1} parent=1 // pred_check_branch
      %23 = sbr.rel (0) target = $region9
    $region8: #{tpu_custom_call.1} parent=1 // pred_region
      %s25 = ssub.s32 2048, 2048
      %26 = vsyncadd [#allocation8], %s25
      %s27 = sshll.u32 [#allocation7], 4
      %s28 = int_to_ptr.vmem [resolvable:$true] %s27
      %33 = dma.hbm_to_vmem [thread:$0]  %s1, 2048, %s28, [#allocation8], 128, 128, 8
    $region9: #{tpu_custom_call.1} parent=1 // pred_fallthru
      _
    // Predicated region
    $region10: #{tpu_custom_call.1} parent=1 // pred_check
      _
    $region11: #{tpu_custom_call.1} parent=1 // pred_check_branch
      %35 = sbr.rel (0) target = $region13
    $region12: #{tpu_custom_call.1} parent=1 // pred_region
      %36 = dma.done [#allocation5], 2048
    $region13: #{tpu_custom_call.1} parent=1 // pred_fallthru
      _
    // Predicated region
    $region14: #{tpu_custom_call.1} parent=1 // pred_check
      _
    $region15: #{tpu_custom_call.1} parent=1 // pred_check_branch
      %38 = sbr.rel (0) target = $region17
    $region16: #{tpu_custom_call.1} parent=1 // pred_region
      %39 = dma.done [#allocation8], 2048
    $region17: #{tpu_custom_call.1} parent=1 // pred_fallthru
      _
    %s40 = smul.u32 0, 128
    %s41 = smul.u32 0, 128
    %p42 = scmp.eq.s32.totalorder 0, 0
    // Predicated region
    $region18: #{tpu_custom_call.1} parent=1 // pred_check
      %p43 = pneg %p42
    $region19: #{tpu_custom_call.1} parent=1 // pred_check_branch
      %45 = sbr.rel (%p43) target = $region21
    $region20: #{tpu_custom_call.1} parent=1 // pred_region
      %vm46 = vcmask 7168
      %47 = vst.msk [vmem:[#allocation2] sm:$0xff] %vm46, -1e+30
      %48 = vst.msk [vmem:[#allocation2 + $0x8] sm:$0xff] %vm46, -1e+30
      %49 = vst.msk [vmem:[#allocation2 + $0x10] sm:$0xff] %vm46, -1e+30
      %50 = vst.msk [vmem:[#allocation2 + $0x18] sm:$0xff] %vm46, -1e+30
      %51 = vst.msk [vmem:[#allocation2 + $0x20] sm:$0xff] %vm46, -1e+30
      %52 = vst.msk [vmem:[#allocation2 + $0x28] sm:$0xff] %vm46, -1e+30
      %53 = vst.msk [vmem:[#allocation2 + $0x30] sm:$0xff] %vm46, -1e+30
      %54 = vst.msk [vmem:[#allocation2 + $0x38] sm:$0xff] %vm46, -1e+30
      %55 = vst.msk [vmem:[#allocation2 + $0x40] sm:$0xff] %vm46, -1e+30
      %56 = vst.msk [vmem:[#allocation2 + $0x48] sm:$0xff] %vm46, -1e+30
      %57 = vst.msk [vmem:[#allocation2 + $0x50] sm:$0xff] %vm46, -1e+30
      %58 = vst.msk [vmem:[#allocation2 + $0x58] sm:$0xff] %vm46, -1e+30
      %59 = vst.msk [vmem:[#allocation2 + $0x60] sm:$0xff] %vm46, -1e+30
      %60 = vst.msk [vmem:[#allocation2 + $0x68] sm:$0xff] %vm46, -1e+30
      %61 = vst.msk [vmem:[#allocation2 + $0x70] sm:$0xff] %vm46, -1e+30
      %62 = vst.msk [vmem:[#allocation2 + $0x78] sm:$0xff] %vm46, -1e+30
      %63 = vst.msk [vmem:[#allocation3] sm:$0xff] %vm46, 0.0
      %64 = vst.msk [vmem:[#allocation3 + $0x8] sm:$0xff] %vm46, 0.0
      %65 = vst.msk [vmem:[#allocation3 + $0x10] sm:$0xff] %vm46, 0.0
      %66 = vst.msk [vmem:[#allocation3 + $0x18] sm:$0xff] %vm46, 0.0
      %67 = vst.msk [vmem:[#allocation3 + $0x20] sm:$0xff] %vm46, 0.0
      %68 = vst.msk [vmem:[#allocation3 + $0x28] sm:$0xff] %vm46, 0.0
      %69 = vst.msk [vmem:[#allocation3 + $0x30] sm:$0xff] %vm46, 0.0
      %70 = vst.msk [vmem:[#allocation3 + $0x38] sm:$0xff] %vm46, 0.0
      %71 = vst.msk [vmem:[#allocation3 + $0x40] sm:$0xff] %vm46, 0.0
      %72 = vst.msk [vmem:[#allocation3 + $0x48] sm:$0xff] %vm46, 0.0
      %73 = vst.msk [vmem:[#allocation3 + $0x50] sm:$0xff] %vm46, 0.0
      %74 = vst.msk [vmem:[#allocation3 + $0x58] sm:$0xff] %vm46, 0.0
      %75 = vst.msk [vmem:[#allocation3 + $0x60] sm:$0xff] %vm46, 0.0
      %76 = vst.msk [vmem:[#allocation3 + $0x68] sm:$0xff] %vm46, 0.0
      %77 = vst.msk [vmem:[#allocation3 + $0x70] sm:$0xff] %vm46, 0.0
      %78 = vst.msk [vmem:[#allocation3 + $0x78] sm:$0xff] %vm46, 0.0
    $region21: #{tpu_custom_call.1} parent=1 // pred_fallthru
      _
    %s79 = scalar_lea.vmem [#allocation7], %s41
    %v80 = vld [vmem:[%s79] sm:$0xff]
    %v81 = vld [vmem:[%s79 + $0x8] sm:$0xff]
    %v82 = vld [vmem:[%s79 + $0x10] sm:$0xff]
    %v83 = vld [vmem:[%s79 + $0x18] sm:$0xff]
    %v84 = vld [vmem:[%s79 + $0x20] sm:$0xff]
    %v85 = vld [vmem:[%s79 + $0x28] sm:$0xff]
    %v86 = vld [vmem:[%s79 + $0x30] sm:$0xff]
    %v87 = vld [vmem:[%s79 + $0x38] sm:$0xff]
    %v88 = vld [vmem:[%s79 + $0x40] sm:$0xff]
    %v89 = vld [vmem:[%s79 + $0x48] sm:$0xff]
    %v90 = vld [vmem:[%s79 + $0x50] sm:$0xff]
    %v91 = vld [vmem:[%s79 + $0x58] sm:$0xff]
    %v92 = vld [vmem:[%s79 + $0x60] sm:$0xff]
    %v93 = vld [vmem:[%s79 + $0x68] sm:$0xff]
    %v94 = vld [vmem:[%s79 + $0x70] sm:$0xff]
    %v95 = vld [vmem:[%s79 + $0x78] sm:$0xff]
    %v96 = vld [vmem:[#allocation4] sm:$0xff]
    %v97 = vld [vmem:[#allocation4 + $0x8] sm:$0xff]
    %v98 = vld [vmem:[#allocation4 + $0x10] sm:$0xff]
    %v99 = vld [vmem:[#allocation4 + $0x18] sm:$0xff]
    %v100 = vld [vmem:[#allocation4 + $0x20] sm:$0xff]
    %v101 = vld [vmem:[#allocation4 + $0x28] sm:$0xff]
    %v102 = vld [vmem:[#allocation4 + $0x30] sm:$0xff]
    %v103 = vld [vmem:[#allocation4 + $0x38] sm:$0xff]
    %v104 = vld [vmem:[#allocation4 + $0x40] sm:$0xff]
    %v105 = vld [vmem:[#allocation4 + $0x48] sm:$0xff]
    %v106 = vld [vmem:[#allocation4 + $0x50] sm:$0xff]
    %v107 = vld [vmem:[#allocation4 + $0x58] sm:$0xff]
    %v108 = vld [vmem:[#allocation4 + $0x60] sm:$0xff]
    %v109 = vld [vmem:[#allocation4 + $0x68] sm:$0xff]
    %v110 = vld [vmem:[#allocation4 + $0x70] sm:$0xff]
    %v111 = vld [vmem:[#allocation4 + $0x78] sm:$0xff]
    %112 = vmatprep.subr.mxu0 0.0
    %113 = vmatpush1.msra.mxu0 %v95
    %114 = vmatprep.subr.mxu0 0.0
    %115 = vmatpush1.msra.mxu0 %v94
    %116 = vmatprep.subr.mxu0 0.0
    %117 = vmatpush1.msra.mxu0 %v93
    %118 = vmatprep.subr.mxu0 0.0
    %119 = vmatpush1.msra.mxu0 %v92
    %120 = vmatprep.subr.mxu0 0.0
    %121 = vmatpush1.msra.mxu0 %v91
    %122 = vmatprep.subr.mxu0 0.0
    %123 = vmatpush1.msra.mxu0 %v90
    %124 = vmatprep.subr.mxu0 0.0
    %125 = vmatpush1.msra.mxu0 %v89
    %126 = vmatprep.subr.mxu0 0.0
    %127 = vmatpush1.msra.mxu0 %v88
    %128 = vmatprep.subr.mxu0 0.0
    %129 = vmatpush1.msra.mxu0 %v87
    %130 = vmatprep.subr.mxu0 0.0
    %131 = vmatpush1.msra.mxu0 %v86
    %132 = vmatprep.subr.mxu0 0.0
    %133 = vmatpush1.msra.mxu0 %v85
    %134 = vmatprep.subr.mxu0 0.0
    %135 = vmatpush1.msra.mxu0 %v84
    %136 = vmatprep.subr.mxu0 0.0
    %137 = vmatpush1.msra.mxu0 %v83
    %138 = vmatprep.subr.mxu0 0.0
    %139 = vmatpush1.msra.mxu0 %v82
    %140 = vmatprep.subr.mxu0 0.0
    %141 = vmatpush1.msra.mxu0 %v81
    %142 = vmatprep.subr.mxu0 0.0
    %143 = vmatpush1.msra.mxu0 %v80
    %144 = vmatprep.subr.mxu0 0.0
    %145 = vmatpush2.msra.mxu0 0.0
    %146 = vmatprep.subr.mxu0 0.0
    %147 = vmatpush2.msra.mxu0 0.0
    %148 = vmatprep.subr.mxu0 0.0
    %149 = vmatpush2.msra.mxu0 0.0
    %150 = vmatprep.subr.mxu0 0.0
    %151 = vmatpush2.msra.mxu0 0.0
    %152 = vmatprep.subr.mxu0 0.0
    %153 = vmatpush2.msra.mxu0 0.0
    %154 = vmatprep.subr.mxu0 0.0
    %155 = vmatpush2.msra.mxu0 0.0
    %156 = vmatprep.subr.mxu0 0.0
    %157 = vmatpush2.msra.mxu0 0.0
    %158 = vmatprep.subr.mxu0 0.0
    %159 = vmatpush2.msra.mxu0 0.0
    %160 = vmatprep.subr.mxu0 0.0
    %161 = vmatpush2.msra.mxu0 0.0
    %162 = vmatprep.subr.mxu0 0.0
    %163 = vmatpush2.msra.mxu0 0.0
    %164 = vmatprep.subr.mxu0 0.0
    %165 = vmatpush2.msra.mxu0 0.0
    %166 = vmatprep.subr.mxu0 0.0
    %167 = vmatpush2.msra.mxu0 0.0
    %168 = vmatprep.subr.mxu0 0.0
    %169 = vmatpush2.msra.mxu0 0.0
    %170 = vmatprep.subr.mxu0 0.0
    %171 = vmatpush2.msra.mxu0 0.0
    %172 = vmatprep.subr.mxu0 0.0
    %173 = vmatpush2.msra.mxu0 0.0
    %174 = vmatprep.subr.mxu0 0.0
    %175 = vmatpush2.msra.mxu0 0.0
    %176 = vmatprep.mubr.f32.mxu0 0.0
    %177 = vmatmul.mubr.f32.gmra.mxu0 %v96
    %v178 = vpop.f32.mrf.mxu0
    %v179 = vadd.f32 0.0, %v178
    %v180 = vpop.f32.mrf.mxu0
    %181 = vmatprep.mubr.f32.mxu0 0.0
    %182 = vmatmul.mubr.f32.gmra.mxu0 %v97
    %v183 = vpop.f32.mrf.mxu0
    %v184 = vadd.f32 0.0, %v183
    %v185 = vpop.f32.mrf.mxu0
    %186 = vmatprep.mubr.f32.mxu0 0.0
    %187 = vmatmul.mubr.f32.gmra.mxu0 %v98
    %v188 = vpop.f32.mrf.mxu0
    %v189 = vadd.f32 0.0, %v188
    %v190 = vpop.f32.mrf.mxu0
    %191 = vmatprep.mubr.f32.mxu0 0.0
    %192 = vmatmul.mubr.f32.gmra.mxu0 %v99
    %v193 = vpop.f32.mrf.mxu0
    %v194 = vadd.f32 0.0, %v193
    %v195 = vpop.f32.mrf.mxu0
    %196 = vmatprep.mubr.f32.mxu0 0.0
    %197 = vmatmul.mubr.f32.gmra.mxu0 %v100
    %v198 = vpop.f32.mrf.mxu0
    %v199 = vadd.f32 0.0, %v198
    %v200 = vpop.f32.mrf.mxu0
    %201 = vmatprep.mubr.f32.mxu0 0.0
    %202 = vmatmul.mubr.f32.gmra.mxu0 %v101
    %v203 = vpop.f32.mrf.mxu0
    %v204 = vadd.f32 0.0, %v203
    %v205 = vpop.f32.mrf.mxu0
    %206 = vmatprep.mubr.f32.mxu0 0.0
    %207 = vmatmul.mubr.f32.gmra.mxu0 %v102
    %v208 = vpop.f32.mrf.mxu0
    %v209 = vadd.f32 0.0, %v208
    %v210 = vpop.f32.mrf.mxu0
    %211 = vmatprep.mubr.f32.mxu0 0.0
    %212 = vmatmul.mubr.f32.gmra.mxu0 %v103
    %v213 = vpop.f32.mrf.mxu0
    %v214 = vadd.f32 0.0, %v213
    %v215 = vpop.f32.mrf.mxu0
    %216 = vmatprep.mubr.f32.mxu0 0.0
    %217 = vmatmul.mubr.f32.gmra.mxu0 %v104
    %v218 = vpop.f32.mrf.mxu0
    %v219 = vadd.f32 0.0, %v218
    %v220 = vpop.f32.mrf.mxu0
    %221 = vmatprep.mubr.f32.mxu0 0.0
    %222 = vmatmul.mubr.f32.gmra.mxu0 %v105
    %v223 = vpop.f32.mrf.mxu0
    %v224 = vadd.f32 0.0, %v223
    %v225 = vpop.f32.mrf.mxu0
    %226 = vmatprep.mubr.f32.mxu0 0.0
    %227 = vmatmul.mubr.f32.gmra.mxu0 %v106
    %v228 = vpop.f32.mrf.mxu0
    %v229 = vadd.f32 0.0, %v228
    %v230 = vpop.f32.mrf.mxu0
    %231 = vmatprep.mubr.f32.mxu0 0.0
    %232 = vmatmul.mubr.f32.gmra.mxu0 %v107
    %v233 = vpop.f32.mrf.mxu0
    %v234 = vadd.f32 0.0, %v233
    %v235 = vpop.f32.mrf.mxu0
    %236 = vmatprep.mubr.f32.mxu0 0.0
    %237 = vmatmul.mubr.f32.gmra.mxu0 %v108
    %v238 = vpop.f32.mrf.mxu0
    %v239 = vadd.f32 0.0, %v238
    %v240 = vpop.f32.mrf.mxu0
    %241 = vmatprep.mubr.f32.mxu0 0.0
    %242 = vmatmul.mubr.f32.gmra.mxu0 %v109
    %v243 = vpop.f32.mrf.mxu0
    %v244 = vadd.f32 0.0, %v243
    %v245 = vpop.f32.mrf.mxu0
    %246 = vmatprep.mubr.f32.mxu0 0.0
    %247 = vmatmul.mubr.f32.gmra.mxu0 %v110
    %v248 = vpop.f32.mrf.mxu0
    %v249 = vadd.f32 0.0, %v248
    %v250 = vpop.f32.mrf.mxu0
    %251 = vmatprep.mubr.f32.mxu0 0.0
    %252 = vmatmul.mubr.f32.gmra.mxu0 %v111
    %v253 = vpop.f32.mrf.mxu0
    %v254 = vadd.f32 0.0, %v253
    %v255 = vpop.f32.mrf.mxu0
    %256 = vdwg.mxu0
    %v257 = vmul.f32 %v179, 2.0
    %v258 = vmul.f32 %v184, 2.0
    %v259 = vmul.f32 %v189, 2.0
    %v260 = vmul.f32 %v194, 2.0
    %v261 = vmul.f32 %v199, 2.0
    %v262 = vmul.f32 %v204, 2.0
    %v263 = vmul.f32 %v209, 2.0
    %v264 = vmul.f32 %v214, 2.0
    %v265 = vmul.f32 %v219, 2.0
    %v266 = vmul.f32 %v224, 2.0
    %v267 = vmul.f32 %v229, 2.0
    %v268 = vmul.f32 %v234, 2.0
    %v269 = vmul.f32 %v239, 2.0
    %v270 = vmul.f32 %v244, 2.0
    %v271 = vmul.f32 %v249, 2.0
    %v272 = vmul.f32 %v254, 2.0
    %s273 = sadd.s32 %s41, 128
    %p274 = scmp.lt.s32.totalorder %s40, %s273
    %s275 = sadd.s32 %s40, 128
    %p276 = scmp.lt.s32.totalorder %s41, %s275
    %p277 = pnand %p274, %p276
    %p278 = pneg %p277
    %p279 = scmp.gt.s32.totalorder %s273, 16
    %p280 = por %p278, %p279
    // Predicated region
    $region22: #{tpu_custom_call.1} parent=1 // pred_check
      %p281 = pneg %p280
    $region23: #{tpu_custom_call.1} parent=1 // pred_check_branch
      %283 = sbr.rel (%p281) target = $region25
    $region24: #{tpu_custom_call.1} parent=1 // pred_region
      %v284 = vlaneseq
      %v285 = vshrl.u32 %v284, 7
      %v286 = vadd.s32 %v285, 8
      %v287 = vadd.s32 %v285, 16
      %v288 = vadd.s32 %v285, 24
      %v289 = vadd.s32 %v285, 32
      %v290 = vadd.s32 %v285, 40
      %v291 = vadd.s32 %v285, 48
      %v292 = vadd.s32 %v285, 56
      %v293 = vadd.s32 %v285, 64
      %v294 = vadd.s32 %v285, 72
      %v295 = vadd.s32 %v285, 80
      %v296 = vadd.s32 %v285, 88
      %v297 = vadd.s32 %v285, 96
      %v298 = vadd.s32 %v285, 104
      %v299 = vadd.s32 %v285, 112
      %v300 = vadd.s32 %v285, 120
      %v301 = vstv %s40
      %v302 = vadd.s32 %v301, %v285
      %v303 = vadd.s32 %v301, %v286
      %v304 = vadd.s32 %v301, %v287
      %v305 = vadd.s32 %v301, %v288
      %v306 = vadd.s32 %v301, %v289
      %v307 = vadd.s32 %v301, %v290
      %v308 = vadd.s32 %v301, %v291
      %v309 = vadd.s32 %v301, %v292
      %v310 = vadd.s32 %v301, %v293
      %v311 = vadd.s32 %v301, %v294
      %v312 = vadd.s32 %v301, %v295
      %v313 = vadd.s32 %v301, %v296
      %v314 = vadd.s32 %v301, %v297
      %v315 = vadd.s32 %v301, %v298
      %v316 = vadd.s32 %v301, %v299
      %v317 = vadd.s32 %v301, %v300
      %v318 = vlaneseq
      %v319 = vand.u32 %v318, 127
      %v320 = vstv %s41
      %v321 = vadd.s32 %v320, %v319
      %vm322 = vcmp.eq.s32.totalorder %v302, %v321
      %vm323 = vcmp.eq.s32.totalorder %v303, %v321
      %vm324 = vcmp.eq.s32.totalorder %v304, %v321
      %vm325 = vcmp.eq.s32.totalorder %v305, %v321
      %vm326 = vcmp.eq.s32.totalorder %v306, %v321
      %vm327 = vcmp.eq.s32.totalorder %v307, %v321
      %vm328 = vcmp.eq.s32.totalorder %v308, %v321
      %vm329 = vcmp.eq.s32.totalorder %v309, %v321
      %vm330 = vcmp.eq.s32.totalorder %v310, %v321
      %vm331 = vcmp.eq.s32.totalorder %v311, %v321
      %vm332 = vcmp.eq.s32.totalorder %v312, %v321
      %vm333 = vcmp.eq.s32.totalorder %v313, %v321
      %vm334 = vcmp.eq.s32.totalorder %v314, %v321
      %vm335 = vcmp.eq.s32.totalorder %v315, %v321
      %vm336 = vcmp.eq.s32.totalorder %v316, %v321
      %vm337 = vcmp.eq.s32.totalorder %v317, %v321
      %vm338 = vcmp.ge.s32.totalorder %v321, 16
      %vm339 = vmor %vm322, %vm338
      %vm340 = vmor %vm323, %vm338
      %vm341 = vmor %vm324, %vm338
      %vm342 = vmor %vm325, %vm338
      %vm343 = vmor %vm326, %vm338
      %vm344 = vmor %vm327, %vm338
      %vm345 = vmor %vm328, %vm338
      %vm346 = vmor %vm329, %vm338
      %vm347 = vmor %vm330, %vm338
      %vm348 = vmor %vm331, %vm338
      %vm349 = vmor %vm332, %vm338
      %vm350 = vmor %vm333, %vm338
      %vm351 = vmor %vm334, %vm338
      %vm352 = vmor %vm335, %vm338
      %vm353 = vmor %vm336, %vm338
      %vm354 = vmor %vm337, %vm338
      %v355 = vsel %vm339, -1e+30, %v257
      %v356 = vsel %vm340, -1e+30, %v258
      %v357 = vsel %vm341, -1e+30, %v259
      %v358 = vsel %vm342, -1e+30, %v260
      %v359 = vsel %vm343, -1e+30, %v261
      %v360 = vsel %vm344, -1e+30, %v262
      %v361 = vsel %vm345, -1e+30, %v263
      %v362 = vsel %vm346, -1e+30, %v264
      %v363 = vsel %vm347, -1e+30, %v265
      %v364 = vsel %vm348, -1e+30, %v266
      %v365 = vsel %vm349, -1e+30, %v267
      %v366 = vsel %vm350, -1e+30, %v268
      %v367 = vsel %vm351, -1e+30, %v269
      %v368 = vsel %vm352, -1e+30, %v270
      %v369 = vsel %vm353, -1e+30, %v271
      %v370 = vsel %vm354, -1e+30, %v272
      %v371 = vld [vmem:[#allocation2] sm:$0xff]
      %v372 = vld [vmem:[#allocation2 + $0x8] sm:$0xff]
      %v373 = vld [vmem:[#allocation2 + $0x10] sm:$0xff]
      %v374 = vld [vmem:[#allocation2 + $0x18] sm:$0xff]
      %v375 = vld [vmem:[#allocation2 + $0x20] sm:$0xff]
      %v376 = vld [vmem:[#allocation2 + $0x28] sm:$0xff]
      %v377 = vld [vmem:[#allocation2 + $0x30] sm:$0xff]
      %v378 = vld [vmem:[#allocation2 + $0x38] sm:$0xff]
      %v379 = vld [vmem:[#allocation2 + $0x40] sm:$0xff]
      %v380 = vld [vmem:[#allocation2 + $0x48] sm:$0xff]
      %v381 = vld [vmem:[#allocation2 + $0x50] sm:$0xff]
      %v382 = vld [vmem:[#allocation2 + $0x58] sm:$0xff]
      %v383 = vld [vmem:[#allocation2 + $0x60] sm:$0xff]
      %v384 = vld [vmem:[#allocation2 + $0x68] sm:$0xff]
      %v385 = vld [vmem:[#allocation2 + $0x70] sm:$0xff]
      %v386 = vld [vmem:[#allocation2 + $0x78] sm:$0xff]
      %387 = vmax.xlane.f32.xlu0 %v355
      %v388 = vpop.xlane.xlu0 %387
      %389 = vmax.xlane.f32.xlu0 %v356
      %v390 = vpop.xlane.xlu0 %389
      %391 = vmax.xlane.f32.xlu0 %v357
      %v392 = vpop.xlane.xlu0 %391
      %393 = vmax.xlane.f32.xlu0 %v358
      %v394 = vpop.xlane.xlu0 %393
      %395 = vmax.xlane.f32.xlu0 %v359
      %v396 = vpop.xlane.xlu0 %395
      %397 = vmax.xlane.f32.xlu0 %v360
      %v398 = vpop.xlane.xlu0 %397
      %399 = vmax.xlane.f32.xlu0 %v361
      %v400 = vpop.xlane.xlu0 %399
      %401 = vmax.xlane.f32.xlu0 %v362
      %v402 = vpop.xlane.xlu0 %401
      %403 = vmax.xlane.f32.xlu0 %v363
      %v404 = vpop.xlane.xlu0 %403
      %405 = vmax.xlane.f32.xlu0 %v364
      %v406 = vpop.xlane.xlu0 %405
      %407 = vmax.xlane.f32.xlu0 %v365
      %v408 = vpop.xlane.xlu0 %407
      %409 = vmax.xlane.f32.xlu0 %v366
      %v410 = vpop.xlane.xlu0 %409
      %411 = vmax.xlane.f32.xlu0 %v367
      %v412 = vpop.xlane.xlu0 %411
      %413 = vmax.xlane.f32.xlu0 %v368
      %v414 = vpop.xlane.xlu0 %413
      %415 = vmax.xlane.f32.xlu0 %v369
      %v416 = vpop.xlane.xlu0 %415
      %417 = vmax.xlane.f32.xlu0 %v370
      %v418 = vpop.xlane.xlu0 %417
      %v419 = vmax.f32 %v371, %v388
      %v420 = vmax.f32 %v372, %v390
      %v421 = vmax.f32 %v373, %v392
      %v422 = vmax.f32 %v374, %v394
      %v423 = vmax.f32 %v375, %v396
      %v424 = vmax.f32 %v376, %v398
      %v425 = vmax.f32 %v377, %v400
      %v426 = vmax.f32 %v378, %v402
      %v427 = vmax.f32 %v379, %v404
      %v428 = vmax.f32 %v380, %v406
      %v429 = vmax.f32 %v381, %v408
      %v430 = vmax.f32 %v382, %v410
      %v431 = vmax.f32 %v383, %v412
      %v432 = vmax.f32 %v384, %v414
      %v433 = vmax.f32 %v385, %v416
      %v434 = vmax.f32 %v386, %v418
      %v435 = vsub.f32 %v371, %v419
      %v436 = vsub.f32 %v372, %v420
      %v437 = vsub.f32 %v373, %v421
      %v438 = vsub.f32 %v374, %v422
      %v439 = vsub.f32 %v375, %v423
      %v440 = vsub.f32 %v376, %v424
      %v441 = vsub.f32 %v377, %v425
      %v442 = vsub.f32 %v378, %v426
      %v443 = vsub.f32 %v379, %v427
      %v444 = vsub.f32 %v380, %v428
      %v445 = vsub.f32 %v381, %v429
      %v446 = vsub.f32 %v382, %v430
      %v447 = vsub.f32 %v383, %v431
      %v448 = vsub.f32 %v384, %v432
      %v449 = vsub.f32 %v385, %v433
      %v450 = vsub.f32 %v386, %v434
      %v451 = vmul.f32 %v435, 1.442695
      %v452 = vpow.pop %v451
      %v453 = vmul.f32 %v436, 1.442695
      %v454 = vpow.pop %v453
      %v455 = vmul.f32 %v437, 1.442695
      %v456 = vpow.pop %v455
      %v457 = vmul.f32 %v438, 1.442695
      %v458 = vpow.pop %v457
      %v459 = vmul.f32 %v439, 1.442695
      %v460 = vpow.pop %v459
      %v461 = vmul.f32 %v440, 1.442695
      %v462 = vpow.pop %v461
      %v463 = vmul.f32 %v441, 1.442695
      %v464 = vpow.pop %v463
      %v465 = vmul.f32 %v442, 1.442695
      %v466 = vpow.pop %v465
      %v467 = vmul.f32 %v443, 1.442695
      %v468 = vpow.pop %v467
      %v469 = vmul.f32 %v444, 1.442695
      %v470 = vpow.pop %v469
      %v471 = vmul.f32 %v445, 1.442695
      %v472 = vpow.pop %v471
      %v473 = vmul.f32 %v446, 1.442695
      %v474 = vpow.pop %v473
      %v475 = vmul.f32 %v447, 1.442695
      %v476 = vpow.pop %v475
      %v477 = vmul.f32 %v448, 1.442695
      %v478 = vpow.pop %v477
      %v479 = vmul.f32 %v449, 1.442695
      %v480 = vpow.pop %v479
      %v481 = vmul.f32 %v450, 1.442695
      %v482 = vpow.pop %v481
      %484 = vset.pattern.permute.xlu0 0
      %485 = vperm.xlu0 %484, %v419
      %v486 = vpop.permute.xlu0 %485
      %489 = vset.pattern.permute.xlu0 0
      %490 = vperm.xlu0 %489, %v420
      %v491 = vpop.permute.xlu0 %490
      %494 = vset.pattern.permute.xlu0 0
      %495 = vperm.xlu0 %494, %v421
      %v496 = vpop.permute.xlu0 %495
      %499 = vset.pattern.permute.xlu0 0
      %500 = vperm.xlu0 %499, %v422
      %v501 = vpop.permute.xlu0 %500
      %504 = vset.pattern.permute.xlu0 0
      %505 = vperm.xlu0 %504, %v423
      %v506 = vpop.permute.xlu0 %505
      %509 = vset.pattern.permute.xlu0 0
      %510 = vperm.xlu0 %509, %v424
      %v511 = vpop.permute.xlu0 %510
      %514 = vset.pattern.permute.xlu0 0
      %515 = vperm.xlu0 %514, %v425
      %v516 = vpop.permute.xlu0 %515
      %519 = vset.pattern.permute.xlu0 0
      %520 = vperm.xlu0 %519, %v426
      %v521 = vpop.permute.xlu0 %520
      %524 = vset.pattern.permute.xlu0 0
      %525 = vperm.xlu0 %524, %v427
      %v526 = vpop.permute.xlu0 %525
      %529 = vset.pattern.permute.xlu0 0
      %530 = vperm.xlu0 %529, %v428
      %v531 = vpop.permute.xlu0 %530
      %534 = vset.pattern.permute.xlu0 0
      %535 = vperm.xlu0 %534, %v429
      %v536 = vpop.permute.xlu0 %535
      %539 = vset.pattern.permute.xlu0 0
      %540 = vperm.xlu0 %539, %v430
      %v541 = vpop.permute.xlu0 %540
      %544 = vset.pattern.permute.xlu0 0
      %545 = vperm.xlu0 %544, %v431
      %v546 = vpop.permute.xlu0 %545
      %549 = vset.pattern.permute.xlu0 0
      %550 = vperm.xlu0 %549, %v432
      %v551 = vpop.permute.xlu0 %550
      %554 = vset.pattern.permute.xlu0 0
      %555 = vperm.xlu0 %554, %v433
      %v556 = vpop.permute.xlu0 %555
      %559 = vset.pattern.permute.xlu0 0
      %560 = vperm.xlu0 %559, %v434
      %v561 = vpop.permute.xlu0 %560
      %v563 = vsub.f32 %v355, %v486
      %v564 = vsub.f32 %v356, %v491
      %v565 = vsub.f32 %v357, %v496
      %v566 = vsub.f32 %v358, %v501
      %v567 = vsub.f32 %v359, %v506
      %v568 = vsub.f32 %v360, %v511
      %v569 = vsub.f32 %v361, %v516
      %v570 = vsub.f32 %v362, %v521
      %v571 = vsub.f32 %v363, %v526
      %v572 = vsub.f32 %v364, %v531
      %v573 = vsub.f32 %v365, %v536
      %v574 = vsub.f32 %v366, %v541
      %v575 = vsub.f32 %v367, %v546
      %v576 = vsub.f32 %v368, %v551
      %v577 = vsub.f32 %v369, %v556
      %v578 = vsub.f32 %v370, %v561
      %v579 = vmul.f32 %v563, 1.442695
      %v580 = vpow.pop %v579
      %v581 = vmul.f32 %v564, 1.442695
      %v582 = vpow.pop %v581
      %v583 = vmul.f32 %v565, 1.442695
      %v584 = vpow.pop %v583
      %v585 = vmul.f32 %v566, 1.442695
      %v586 = vpow.pop %v585
      %v587 = vmul.f32 %v567, 1.442695
      %v588 = vpow.pop %v587
      %v589 = vmul.f32 %v568, 1.442695
      %v590 = vpow.pop %v589
      %v591 = vmul.f32 %v569, 1.442695
      %v592 = vpow.pop %v591
      %v593 = vmul.f32 %v570, 1.442695
      %v594 = vpow.pop %v593
      %v595 = vmul.f32 %v571, 1.442695
      %v596 = vpow.pop %v595
      %v597 = vmul.f32 %v572, 1.442695
      %v598 = vpow.pop %v597
      %v599 = vmul.f32 %v573, 1.442695
      %v600 = vpow.pop %v599
      %v601 = vmul.f32 %v574, 1.442695
      %v602 = vpow.pop %v601
      %v603 = vmul.f32 %v575, 1.442695
      %v604 = vpow.pop %v603
      %v605 = vmul.f32 %v576, 1.442695
      %v606 = vpow.pop %v605
      %v607 = vmul.f32 %v577, 1.442695
      %v608 = vpow.pop %v607
      %v609 = vmul.f32 %v578, 1.442695
      %v610 = vpow.pop %v609
      %v611 = vld [vmem:[#allocation3] sm:$0xff]
      %v612 = vld [vmem:[#allocation3 + $0x8] sm:$0xff]
      %v613 = vld [vmem:[#allocation3 + $0x10] sm:$0xff]
      %v614 = vld [vmem:[#allocation3 + $0x18] sm:$0xff]
      %v615 = vld [vmem:[#allocation3 + $0x20] sm:$0xff]
      %v616 = vld [vmem:[#allocation3 + $0x28] sm:$0xff]
      %v617 = vld [vmem:[#allocation3 + $0x30] sm:$0xff]
      %v618 = vld [vmem:[#allocation3 + $0x38] sm:$0xff]
      %v619 = vld [vmem:[#allocation3 + $0x40] sm:$0xff]
      %v620 = vld [vmem:[#allocation3 + $0x48] sm:$0xff]
      %v621 = vld [vmem:[#allocation3 + $0x50] sm:$0xff]
      %v622 = vld [vmem:[#allocation3 + $0x58] sm:$0xff]
      %v623 = vld [vmem:[#allocation3 + $0x60] sm:$0xff]
      %v624 = vld [vmem:[#allocation3 + $0x68] sm:$0xff]
      %v625 = vld [vmem:[#allocation3 + $0x70] sm:$0xff]
      %v626 = vld [vmem:[#allocation3 + $0x78] sm:$0xff]
      %v627 = vmul.f32 %v452, %v611
      %v628 = vmul.f32 %v454, %v612
      %v629 = vmul.f32 %v456, %v613
      %v630 = vmul.f32 %v458, %v614
      %v631 = vmul.f32 %v460, %v615
      %v632 = vmul.f32 %v462, %v616
      %v633 = vmul.f32 %v464, %v617
      %v634 = vmul.f32 %v466, %v618
      %v635 = vmul.f32 %v468, %v619
      %v636 = vmul.f32 %v470, %v620
      %v637 = vmul.f32 %v472, %v621
      %v638 = vmul.f32 %v474, %v622
      %v639 = vmul.f32 %v476, %v623
      %v640 = vmul.f32 %v478, %v624
      %v641 = vmul.f32 %v480, %v625
      %v642 = vmul.f32 %v482, %v626
      %643 = vadd.xlane.f32.xlu0 %v580
      %v644 = vpop.xlane.xlu0 %643
      %645 = vadd.xlane.f32.xlu0 %v582
      %v646 = vpop.xlane.xlu0 %645
      %647 = vadd.xlane.f32.xlu0 %v584
      %v648 = vpop.xlane.xlu0 %647
      %649 = vadd.xlane.f32.xlu0 %v586
      %v650 = vpop.xlane.xlu0 %649
      %651 = vadd.xlane.f32.xlu0 %v588
      %v652 = vpop.xlane.xlu0 %651
      %653 = vadd.xlane.f32.xlu0 %v590
      %v654 = vpop.xlane.xlu0 %653
      %655 = vadd.xlane.f32.xlu0 %v592
      %v656 = vpop.xlane.xlu0 %655
      %657 = vadd.xlane.f32.xlu0 %v594
      %v658 = vpop.xlane.xlu0 %657
      %659 = vadd.xlane.f32.xlu0 %v596
      %v660 = vpop.xlane.xlu0 %659
      %661 = vadd.xlane.f32.xlu0 %v598
      %v662 = vpop.xlane.xlu0 %661
      %663 = vadd.xlane.f32.xlu0 %v600
      %v664 = vpop.xlane.xlu0 %663
      %665 = vadd.xlane.f32.xlu0 %v602
      %v666 = vpop.xlane.xlu0 %665
      %667 = vadd.xlane.f32.xlu0 %v604
      %v668 = vpop.xlane.xlu0 %667
      %669 = vadd.xlane.f32.xlu0 %v606
      %v670 = vpop.xlane.xlu0 %669
      %671 = vadd.xlane.f32.xlu0 %v608
      %v672 = vpop.xlane.xlu0 %671
      %673 = vadd.xlane.f32.xlu0 %v610
      %v674 = vpop.xlane.xlu0 %673
      %v675 = vadd.f32 %v627, %v644
      %v676 = vadd.f32 %v628, %v646
      %v677 = vadd.f32 %v629, %v648
      %v678 = vadd.f32 %v630, %v650
      %v679 = vadd.f32 %v631, %v652
      %v680 = vadd.f32 %v632, %v654
      %v681 = vadd.f32 %v633, %v656
      %v682 = vadd.f32 %v634, %v658
      %v683 = vadd.f32 %v635, %v660
      %v684 = vadd.f32 %v636, %v662
      %v685 = vadd.f32 %v637, %v664
      %v686 = vadd.f32 %v638, %v666
      %v687 = vadd.f32 %v639, %v668
      %v688 = vadd.f32 %v640, %v670
      %v689 = vadd.f32 %v641, %v672
      %v690 = vadd.f32 %v642, %v674
      %vm691 = vcmask 7168
      %692 = vst.msk [vmem:[#allocation3] sm:$0xff] %vm691, %v675
      %693 = vst.msk [vmem:[#allocation3 + $0x8] sm:$0xff] %vm691, %v676
      %694 = vst.msk [vmem:[#allocation3 + $0x10] sm:$0xff] %vm691, %v677
      %695 = vst.msk [vmem:[#allocation3 + $0x18] sm:$0xff] %vm691, %v678
      %696 = vst.msk [vmem:[#allocation3 + $0x20] sm:$0xff] %vm691, %v679
      %697 = vst.msk [vmem:[#allocation3 + $0x28] sm:$0xff] %vm691, %v680
      %698 = vst.msk [vmem:[#allocation3 + $0x30] sm:$0xff] %vm691, %v681
      %699 = vst.msk [vmem:[#allocation3 + $0x38] sm:$0xff] %vm691, %v682
      %700 = vst.msk [vmem:[#allocation3 + $0x40] sm:$0xff] %vm691, %v683
      %701 = vst.msk [vmem:[#allocation3 + $0x48] sm:$0xff] %vm691, %v684
      %702 = vst.msk [vmem:[#allocation3 + $0x50] sm:$0xff] %vm691, %v685
      %703 = vst.msk [vmem:[#allocation3 + $0x58] sm:$0xff] %vm691, %v686
      %704 = vst.msk [vmem:[#allocation3 + $0x60] sm:$0xff] %vm691, %v687
      %705 = vst.msk [vmem:[#allocation3 + $0x68] sm:$0xff] %vm691, %v688
      %706 = vst.msk [vmem:[#allocation3 + $0x70] sm:$0xff] %vm691, %v689
      %707 = vst.msk [vmem:[#allocation3 + $0x78] sm:$0xff] %vm691, %v690
      %708 = vst.msk [vmem:[#allocation2] sm:$0xff] %vm691, %v419
      %709 = vst.msk [vmem:[#allocation2 + $0x8] sm:$0xff] %vm691, %v420
      %710 = vst.msk [vmem:[#allocation2 + $0x10] sm:$0xff] %vm691, %v421
      %711 = vst.msk [vmem:[#allocation2 + $0x18] sm:$0xff] %vm691, %v422
      %712 = vst.msk [vmem:[#allocation2 + $0x20] sm:$0xff] %vm691, %v423
      %713 = vst.msk [vmem:[#allocation2 + $0x28] sm:$0xff] %vm691, %v424
      %714 = vst.msk [vmem:[#allocation2 + $0x30] sm:$0xff] %vm691, %v425
      %715 = vst.msk [vmem:[#allocation2 + $0x38] sm:$0xff] %vm691, %v426
      %716 = vst.msk [vmem:[#allocation2 + $0x40] sm:$0xff] %vm691, %v427
      %717 = vst.msk [vmem:[#allocation2 + $0x48] sm:$0xff] %vm691, %v428
      %718 = vst.msk [vmem:[#allocation2 + $0x50] sm:$0xff] %vm691, %v429
      %719 = vst.msk [vmem:[#allocation2 + $0x58] sm:$0xff] %vm691, %v430
      %720 = vst.msk [vmem:[#allocation2 + $0x60] sm:$0xff] %vm691, %v431
      %721 = vst.msk [vmem:[#allocation2 + $0x68] sm:$0xff] %vm691, %v432
      %722 = vst.msk [vmem:[#allocation2 + $0x70] sm:$0xff] %vm691, %v433
      %723 = vst.msk [vmem:[#allocation2 + $0x78] sm:$0xff] %vm691, %v434
    $region25: #{tpu_custom_call.1} parent=1 // pred_fallthru
      _
    %p724 = pneg %p280
    // Predicated region
    $region26: #{tpu_custom_call.1} parent=1 // pred_check
      _
    $region27: #{tpu_custom_call.1} parent=1 // pred_check_branch
      %726 = sbr.rel (%p280) target = $region29
    $region28: #{tpu_custom_call.1} parent=1 // pred_region
      %v727 = vld [vmem:[#allocation2] sm:$0xff]
      %v728 = vld [vmem:[#allocation2 + $0x8] sm:$0xff]
      %v729 = vld [vmem:[#allocation2 + $0x10] sm:$0xff]
      %v730 = vld [vmem:[#allocation2 + $0x18] sm:$0xff]
      %v731 = vld [vmem:[#allocation2 + $0x20] sm:$0xff]
      %v732 = vld [vmem:[#allocation2 + $0x28] sm:$0xff]
      %v733 = vld [vmem:[#allocation2 + $0x30] sm:$0xff]
      %v734 = vld [vmem:[#allocation2 + $0x38] sm:$0xff]
      %v735 = vld [vmem:[#allocation2 + $0x40] sm:$0xff]
      %v736 = vld [vmem:[#allocation2 + $0x48] sm:$0xff]
      %v737 = vld [vmem:[#allocation2 + $0x50] sm:$0xff]
      %v738 = vld [vmem:[#allocation2 + $0x58] sm:$0xff]
      %v739 = vld [vmem:[#allocation2 + $0x60] sm:$0xff]
      %v740 = vld [vmem:[#allocation2 + $0x68] sm:$0xff]
      %v741 = vld [vmem:[#allocation2 + $0x70] sm:$0xff]
      %v742 = vld [vmem:[#allocation2 + $0x78] sm:$0xff]
      %743 = vmax.xlane.f32.xlu0 %v257
      %v744 = vpop.xlane.xlu0 %743
      %745 = vmax.xlane.f32.xlu0 %v258
      %v746 = vpop.xlane.xlu0 %745
      %747 = vmax.xlane.f32.xlu0 %v259
      %v748 = vpop.xlane.xlu0 %747
      %749 = vmax.xlane.f32.xlu0 %v260
      %v750 = vpop.xlane.xlu0 %749
      %751 = vmax.xlane.f32.xlu0 %v261
      %v752 = vpop.xlane.xlu0 %751
      %753 = vmax.xlane.f32.xlu0 %v262
      %v754 = vpop.xlane.xlu0 %753
      %755 = vmax.xlane.f32.xlu0 %v263
      %v756 = vpop.xlane.xlu0 %755
      %757 = vmax.xlane.f32.xlu0 %v264
      %v758 = vpop.xlane.xlu0 %757
      %759 = vmax.xlane.f32.xlu0 %v265
      %v760 = vpop.xlane.xlu0 %759
      %761 = vmax.xlane.f32.xlu0 %v266
      %v762 = vpop.xlane.xlu0 %761
      %763 = vmax.xlane.f32.xlu0 %v267
      %v764 = vpop.xlane.xlu0 %763
      %765 = vmax.xlane.f32.xlu0 %v268
      %v766 = vpop.xlane.xlu0 %765
      %767 = vmax.xlane.f32.xlu0 %v269
      %v768 = vpop.xlane.xlu0 %767
      %769 = vmax.xlane.f32.xlu0 %v270
      %v770 = vpop.xlane.xlu0 %769
      %771 = vmax.xlane.f32.xlu0 %v271
      %v772 = vpop.xlane.xlu0 %771
      %773 = vmax.xlane.f32.xlu0 %v272
      %v774 = vpop.xlane.xlu0 %773
      %v775 = vmax.f32 %v727, %v744
      %v776 = vmax.f32 %v728, %v746
      %v777 = vmax.f32 %v729, %v748
      %v778 = vmax.f32 %v730, %v750
      %v779 = vmax.f32 %v731, %v752
      %v780 = vmax.f32 %v732, %v754
      %v781 = vmax.f32 %v733, %v756
      %v782 = vmax.f32 %v734, %v758
      %v783 = vmax.f32 %v735, %v760
      %v784 = vmax.f32 %v736, %v762
      %v785 = vmax.f32 %v737, %v764
      %v786 = vmax.f32 %v738, %v766
      %v787 = vmax.f32 %v739, %v768
      %v788 = vmax.f32 %v740, %v770
      %v789 = vmax.f32 %v741, %v772
      %v790 = vmax.f32 %v742, %v774
      %v791 = vsub.f32 %v727, %v775
      %v792 = vsub.f32 %v728, %v776
      %v793 = vsub.f32 %v729, %v777
      %v794 = vsub.f32 %v730, %v778
      %v795 = vsub.f32 %v731, %v779
      %v796 = vsub.f32 %v732, %v780
      %v797 = vsub.f32 %v733, %v781
      %v798 = vsub.f32 %v734, %v782
      %v799 = vsub.f32 %v735, %v783
      %v800 = vsub.f32 %v736, %v784
      %v801 = vsub.f32 %v737, %v785
      %v802 = vsub.f32 %v738, %v786
      %v803 = vsub.f32 %v739, %v787
      %v804 = vsub.f32 %v740, %v788
      %v805 = vsub.f32 %v741, %v789
      %v806 = vsub.f32 %v742, %v790
      %v807 = vmul.f32 %v791, 1.442695
      %v808 = vpow.pop %v807
      %v809 = vmul.f32 %v792, 1.442695
      %v810 = vpow.pop %v809
      %v811 = vmul.f32 %v793, 1.442695
      %v812 = vpow.pop %v811
      %v813 = vmul.f32 %v794, 1.442695
      %v814 = vpow.pop %v813
      %v815 = vmul.f32 %v795, 1.442695
      %v816 = vpow.pop %v815
      %v817 = vmul.f32 %v796, 1.442695
      %v818 = vpow.pop %v817
      %v819 = vmul.f32 %v797, 1.442695
      %v820 = vpow.pop %v819
      %v821 = vmul.f32 %v798, 1.442695
      %v822 = vpow.pop %v821
      %v823 = vmul.f32 %v799, 1.442695
      %v824 = vpow.pop %v823
      %v825 = vmul.f32 %v800, 1.442695
      %v826 = vpow.pop %v825
      %v827 = vmul.f32 %v801, 1.442695
      %v828 = vpow.pop %v827
      %v829 = vmul.f32 %v802, 1.442695
      %v830 = vpow.pop %v829
      %v831 = vmul.f32 %v803, 1.442695
      %v832 = vpow.pop %v831
      %v833 = vmul.f32 %v804, 1.442695
      %v834 = vpow.pop %v833
      %v835 = vmul.f32 %v805, 1.442695
      %v836 = vpow.pop %v835
      %v837 = vmul.f32 %v806, 1.442695
      %v838 = vpow.pop %v837
      %840 = vset.pattern.permute.xlu0 0
      %841 = vperm.xlu0 %840, %v775
      %v842 = vpop.permute.xlu0 %841
      %845 = vset.pattern.permute.xlu0 0
      %846 = vperm.xlu0 %845, %v776
      %v847 = vpop.permute.xlu0 %846
      %850 = vset.pattern.permute.xlu0 0
      %851 = vperm.xlu0 %850, %v777
      %v852 = vpop.permute.xlu0 %851
      %855 = vset.pattern.permute.xlu0 0
      %856 = vperm.xlu0 %855, %v778
      %v857 = vpop.permute.xlu0 %856
      %860 = vset.pattern.permute.xlu0 0
      %861 = vperm.xlu0 %860, %v779
      %v862 = vpop.permute.xlu0 %861
      %865 = vset.pattern.permute.xlu0 0
      %866 = vperm.xlu0 %865, %v780
      %v867 = vpop.permute.xlu0 %866
      %870 = vset.pattern.permute.xlu0 0
      %871 = vperm.xlu0 %870, %v781
      %v872 = vpop.permute.xlu0 %871
      %875 = vset.pattern.permute.xlu0 0
      %876 = vperm.xlu0 %875, %v782
      %v877 = vpop.permute.xlu0 %876
      %880 = vset.pattern.permute.xlu0 0
      %881 = vperm.xlu0 %880, %v783
      %v882 = vpop.permute.xlu0 %881
      %885 = vset.pattern.permute.xlu0 0
      %886 = vperm.xlu0 %885, %v784
      %v887 = vpop.permute.xlu0 %886
      %890 = vset.pattern.permute.xlu0 0
      %891 = vperm.xlu0 %890, %v785
      %v892 = vpop.permute.xlu0 %891
      %895 = vset.pattern.permute.xlu0 0
      %896 = vperm.xlu0 %895, %v786
      %v897 = vpop.permute.xlu0 %896
      %900 = vset.pattern.permute.xlu0 0
      %901 = vperm.xlu0 %900, %v787
      %v902 = vpop.permute.xlu0 %901
      %905 = vset.pattern.permute.xlu0 0
      %906 = vperm.xlu0 %905, %v788
      %v907 = vpop.permute.xlu0 %906
      %910 = vset.pattern.permute.xlu0 0
      %911 = vperm.xlu0 %910, %v789
      %v912 = vpop.permute.xlu0 %911
      %915 = vset.pattern.permute.xlu0 0
      %916 = vperm.xlu0 %915, %v790
      %v917 = vpop.permute.xlu0 %916
      %v919 = vsub.f32 %v257, %v842
      %v920 = vsub.f32 %v258, %v847
      %v921 = vsub.f32 %v259, %v852
      %v922 = vsub.f32 %v260, %v857
      %v923 = vsub.f32 %v261, %v862
      %v924 = vsub.f32 %v262, %v867
      %v925 = vsub.f32 %v263, %v872
      %v926 = vsub.f32 %v264, %v877
      %v927 = vsub.f32 %v265, %v882
      %v928 = vsub.f32 %v266, %v887
      %v929 = vsub.f32 %v267, %v892
      %v930 = vsub.f32 %v268, %v897
      %v931 = vsub.f32 %v269, %v902
      %v932 = vsub.f32 %v270, %v907
      %v933 = vsub.f32 %v271, %v912
      %v934 = vsub.f32 %v272, %v917
      %v935 = vmul.f32 %v919, 1.442695
      %v936 = vpow.pop %v935
      %v937 = vmul.f32 %v920, 1.442695
      %v938 = vpow.pop %v937
      %v939 = vmul.f32 %v921, 1.442695
      %v940 = vpow.pop %v939
      %v941 = vmul.f32 %v922, 1.442695
      %v942 = vpow.pop %v941
      %v943 = vmul.f32 %v923, 1.442695
      %v944 = vpow.pop %v943
      %v945 = vmul.f32 %v924, 1.442695
      %v946 = vpow.pop %v945
      %v947 = vmul.f32 %v925, 1.442695
      %v948 = vpow.pop %v947
      %v949 = vmul.f32 %v926, 1.442695
      %v950 = vpow.pop %v949
      %v951 = vmul.f32 %v927, 1.442695
      %v952 = vpow.pop %v951
      %v953 = vmul.f32 %v928, 1.442695
      %v954 = vpow.pop %v953
      %v955 = vmul.f32 %v929, 1.442695
      %v956 = vpow.pop %v955
      %v957 = vmul.f32 %v930, 1.442695
      %v958 = vpow.pop %v957
      %v959 = vmul.f32 %v931, 1.442695
      %v960 = vpow.pop %v959
      %v961 = vmul.f32 %v932, 1.442695
      %v962 = vpow.pop %v961
      %v963 = vmul.f32 %v933, 1.442695
      %v964 = vpow.pop %v963
      %v965 = vmul.f32 %v934, 1.442695
      %v966 = vpow.pop %v965
      %v967 = vld [vmem:[#allocation3] sm:$0xff]
      %v968 = vld [vmem:[#allocation3 + $0x8] sm:$0xff]
      %v969 = vld [vmem:[#allocation3 + $0x10] sm:$0xff]
      %v970 = vld [vmem:[#allocation3 + $0x18] sm:$0xff]
      %v971 = vld [vmem:[#allocation3 + $0x20] sm:$0xff]
      %v972 = vld [vmem:[#allocation3 + $0x28] sm:$0xff]
      %v973 = vld [vmem:[#allocation3 + $0x30] sm:$0xff]
      %v974 = vld [vmem:[#allocation3 + $0x38] sm:$0xff]
      %v975 = vld [vmem:[#allocation3 + $0x40] sm:$0xff]
      %v976 = vld [vmem:[#allocation3 + $0x48] sm:$0xff]
      %v977 = vld [vmem:[#allocation3 + $0x50] sm:$0xff]
      %v978 = vld [vmem:[#allocation3 + $0x58] sm:$0xff]
      %v979 = vld [vmem:[#allocation3 + $0x60] sm:$0xff]
      %v980 = vld [vmem:[#allocation3 + $0x68] sm:$0xff]
      %v981 = vld [vmem:[#allocation3 + $0x70] sm:$0xff]
      %v982 = vld [vmem:[#allocation3 + $0x78] sm:$0xff]
      %v983 = vmul.f32 %v808, %v967
      %v984 = vmul.f32 %v810, %v968
      %v985 = vmul.f32 %v812, %v969
      %v986 = vmul.f32 %v814, %v970
      %v987 = vmul.f32 %v816, %v971
      %v988 = vmul.f32 %v818, %v972
      %v989 = vmul.f32 %v820, %v973
      %v990 = vmul.f32 %v822, %v974
      %v991 = vmul.f32 %v824, %v975
      %v992 = vmul.f32 %v826, %v976
      %v993 = vmul.f32 %v828, %v977
      %v994 = vmul.f32 %v830, %v978
      %v995 = vmul.f32 %v832, %v979
      %v996 = vmul.f32 %v834, %v980
      %v997 = vmul.f32 %v836, %v981
      %v998 = vmul.f32 %v838, %v982
      %999 = vadd.xlane.f32.xlu0 %v936
      %v1000 = vpop.xlane.xlu0 %999
      %1001 = vadd.xlane.f32.xlu0 %v938
      %v1002 = vpop.xlane.xlu0 %1001
      %1003 = vadd.xlane.f32.xlu0 %v940
      %v1004 = vpop.xlane.xlu0 %1003
      %1005 = vadd.xlane.f32.xlu0 %v942
      %v1006 = vpop.xlane.xlu0 %1005
      %1007 = vadd.xlane.f32.xlu0 %v944
      %v1008 = vpop.xlane.xlu0 %1007
      %1009 = vadd.xlane.f32.xlu0 %v946
      %v1010 = vpop.xlane.xlu0 %1009
      %1011 = vadd.xlane.f32.xlu0 %v948
      %v1012 = vpop.xlane.xlu0 %1011
      %1013 = vadd.xlane.f32.xlu0 %v950
      %v1014 = vpop.xlane.xlu0 %1013
      %1015 = vadd.xlane.f32.xlu0 %v952
      %v1016 = vpop.xlane.xlu0 %1015
      %1017 = vadd.xlane.f32.xlu0 %v954
      %v1018 = vpop.xlane.xlu0 %1017
      %1019 = vadd.xlane.f32.xlu0 %v956
      %v1020 = vpop.xlane.xlu0 %1019
      %1021 = vadd.xlane.f32.xlu0 %v958
      %v1022 = vpop.xlane.xlu0 %1021
      %1023 = vadd.xlane.f32.xlu0 %v960
      %v1024 = vpop.xlane.xlu0 %1023
      %1025 = vadd.xlane.f32.xlu0 %v962
      %v1026 = vpop.xlane.xlu0 %1025
      %1027 = vadd.xlane.f32.xlu0 %v964
      %v1028 = vpop.xlane.xlu0 %1027
      %1029 = vadd.xlane.f32.xlu0 %v966
      %v1030 = vpop.xlane.xlu0 %1029
      %v1031 = vadd.f32 %v983, %v1000
      %v1032 = vadd.f32 %v984, %v1002
      %v1033 = vadd.f32 %v985, %v1004
      %v1034 = vadd.f32 %v986, %v1006
      %v1035 = vadd.f32 %v987, %v1008
      %v1036 = vadd.f32 %v988, %v1010
      %v1037 = vadd.f32 %v989, %v1012
      %v1038 = vadd.f32 %v990, %v1014
      %v1039 = vadd.f32 %v991, %v1016
      %v1040 = vadd.f32 %v992, %v1018
      %v1041 = vadd.f32 %v993, %v1020
      %v1042 = vadd.f32 %v994, %v1022
      %v1043 = vadd.f32 %v995, %v1024
      %v1044 = vadd.f32 %v996, %v1026
      %v1045 = vadd.f32 %v997, %v1028
      %v1046 = vadd.f32 %v998, %v1030
      %vm1047 = vcmask 7168
      %1048 = vst.msk [vmem:[#allocation3] sm:$0xff] %vm1047, %v1031
      %1049 = vst.msk [vmem:[#allocation3 + $0x8] sm:$0xff] %vm1047, %v1032
      %1050 = vst.msk [vmem:[#allocation3 + $0x10] sm:$0xff] %vm1047, %v1033
      %1051 = vst.msk [vmem:[#allocation3 + $0x18] sm:$0xff] %vm1047, %v1034
      %1052 = vst.msk [vmem:[#allocation3 + $0x20] sm:$0xff] %vm1047, %v1035
      %1053 = vst.msk [vmem:[#allocation3 + $0x28] sm:$0xff] %vm1047, %v1036
      %1054 = vst.msk [vmem:[#allocation3 + $0x30] sm:$0xff] %vm1047, %v1037
      %1055 = vst.msk [vmem:[#allocation3 + $0x38] sm:$0xff] %vm1047, %v1038
      %1056 = vst.msk [vmem:[#allocation3 + $0x40] sm:$0xff] %vm1047, %v1039
      %1057 = vst.msk [vmem:[#allocation3 + $0x48] sm:$0xff] %vm1047, %v1040
      %1058 = vst.msk [vmem:[#allocation3 + $0x50] sm:$0xff] %vm1047, %v1041
      %1059 = vst.msk [vmem:[#allocation3 + $0x58] sm:$0xff] %vm1047, %v1042
      %1060 = vst.msk [vmem:[#allocation3 + $0x60] sm:$0xff] %vm1047, %v1043
      %1061 = vst.msk [vmem:[#allocation3 + $0x68] sm:$0xff] %vm1047, %v1044
      %1062 = vst.msk [vmem:[#allocation3 + $0x70] sm:$0xff] %vm1047, %v1045
      %1063 = vst.msk [vmem:[#allocation3 + $0x78] sm:$0xff] %vm1047, %v1046
      %1064 = vst.msk [vmem:[#allocation2] sm:$0xff] %vm1047, %v775
      %1065 = vst.msk [vmem:[#allocation2 + $0x8] sm:$0xff] %vm1047, %v776
      %1066 = vst.msk [vmem:[#allocation2 + $0x10] sm:$0xff] %vm1047, %v777
      %1067 = vst.msk [vmem:[#allocation2 + $0x18] sm:$0xff] %vm1047, %v778
      %1068 = vst.msk [vmem:[#allocation2 + $0x20] sm:$0xff] %vm1047, %v779
      %1069 = vst.msk [vmem:[#allocation2 + $0x28] sm:$0xff] %vm1047, %v780
      %1070 = vst.msk [vmem:[#allocation2 + $0x30] sm:$0xff] %vm1047, %v781
      %1071 = vst.msk [vmem:[#allocation2 + $0x38] sm:$0xff] %vm1047, %v782
      %1072 = vst.msk [vmem:[#allocation2 + $0x40] sm:$0xff] %vm1047, %v783
      %1073 = vst.msk [vmem:[#allocation2 + $0x48] sm:$0xff] %vm1047, %v784
      %1074 = vst.msk [vmem:[#allocation2 + $0x50] sm:$0xff] %vm1047, %v785
      %1075 = vst.msk [vmem:[#allocation2 + $0x58] sm:$0xff] %vm1047, %v786
      %1076 = vst.msk [vmem:[#allocation2 + $0x60] sm:$0xff] %vm1047, %v787
      %1077 = vst.msk [vmem:[#allocation2 + $0x68] sm:$0xff] %vm1047, %v788
      %1078 = vst.msk [vmem:[#allocation2 + $0x70] sm:$0xff] %vm1047, %v789
      %1079 = vst.msk [vmem:[#allocation2 + $0x78] sm:$0xff] %vm1047, %v790
    $region29: #{tpu_custom_call.1} parent=1 // pred_fallthru
      _
    // Predicated region
    $region30: #{tpu_custom_call.1} parent=1 // pred_check
      %p1080 = pneg %p42
    $region31: #{tpu_custom_call.1} parent=1 // pred_check_branch
      %1082 = sbr.rel (%p1080) target = $region33
    $region32: #{tpu_custom_call.1} parent=1 // pred_region
      %v1083 = vld [vmem:[#allocation2] sm:$0xff]
      %v1084 = vld [vmem:[#allocation2 + $0x8] sm:$0xff]
      %v1085 = vld [vmem:[#allocation2 + $0x10] sm:$0xff]
      %v1086 = vld [vmem:[#allocation2 + $0x18] sm:$0xff]
      %v1087 = vld [vmem:[#allocation2 + $0x20] sm:$0xff]
      %v1088 = vld [vmem:[#allocation2 + $0x28] sm:$0xff]
      %v1089 = vld [vmem:[#allocation2 + $0x30] sm:$0xff]
      %v1090 = vld [vmem:[#allocation2 + $0x38] sm:$0xff]
      %v1091 = vld [vmem:[#allocation2 + $0x40] sm:$0xff]
      %v1092 = vld [vmem:[#allocation2 + $0x48] sm:$0xff]
      %v1093 = vld [vmem:[#allocation2 + $0x50] sm:$0xff]
      %v1094 = vld [vmem:[#allocation2 + $0x58] sm:$0xff]
      %v1095 = vld [vmem:[#allocation2 + $0x60] sm:$0xff]
      %v1096 = vld [vmem:[#allocation2 + $0x68] sm:$0xff]
      %v1097 = vld [vmem:[#allocation2 + $0x70] sm:$0xff]
      %v1098 = vld [vmem:[#allocation2 + $0x78] sm:$0xff]
      %v1099 = vld [vmem:[#allocation3] sm:$0xff]
      %v1100 = vld [vmem:[#allocation3 + $0x8] sm:$0xff]
      %v1101 = vld [vmem:[#allocation3 + $0x10] sm:$0xff]
      %v1102 = vld [vmem:[#allocation3 + $0x18] sm:$0xff]
      %v1103 = vld [vmem:[#allocation3 + $0x20] sm:$0xff]
      %v1104 = vld [vmem:[#allocation3 + $0x28] sm:$0xff]
      %v1105 = vld [vmem:[#allocation3 + $0x30] sm:$0xff]
      %v1106 = vld [vmem:[#allocation3 + $0x38] sm:$0xff]
      %v1107 = vld [vmem:[#allocation3 + $0x40] sm:$0xff]
      %v1108 = vld [vmem:[#allocation3 + $0x48] sm:$0xff]
      %v1109 = vld [vmem:[#allocation3 + $0x50] sm:$0xff]
      %v1110 = vld [vmem:[#allocation3 + $0x58] sm:$0xff]
      %v1111 = vld [vmem:[#allocation3 + $0x60] sm:$0xff]
      %v1112 = vld [vmem:[#allocation3 + $0x68] sm:$0xff]
      %v1113 = vld [vmem:[#allocation3 + $0x70] sm:$0xff]
      %v1114 = vld [vmem:[#allocation3 + $0x78] sm:$0xff]
      %v1115 = vlog2.pop %v1099
      %v1116 = vmul.f32 %v1115, 0.6931472
      %v1117 = vlog2.pop %v1100
      %v1118 = vmul.f32 %v1117, 0.6931472
      %v1119 = vlog2.pop %v1101
      %v1120 = vmul.f32 %v1119, 0.6931472
      %v1121 = vlog2.pop %v1102
      %v1122 = vmul.f32 %v1121, 0.6931472
      %v1123 = vlog2.pop %v1103
      %v1124 = vmul.f32 %v1123, 0.6931472
      %v1125 = vlog2.pop %v1104
      %v1126 = vmul.f32 %v1125, 0.6931472
      %v1127 = vlog2.pop %v1105
      %v1128 = vmul.f32 %v1127, 0.6931472
      %v1129 = vlog2.pop %v1106
      %v1130 = vmul.f32 %v1129, 0.6931472
      %v1131 = vlog2.pop %v1107
      %v1132 = vmul.f32 %v1131, 0.6931472
      %v1133 = vlog2.pop %v1108
      %v1134 = vmul.f32 %v1133, 0.6931472
      %v1135 = vlog2.pop %v1109
      %v1136 = vmul.f32 %v1135, 0.6931472
      %v1137 = vlog2.pop %v1110
      %v1138 = vmul.f32 %v1137, 0.6931472
      %v1139 = vlog2.pop %v1111
      %v1140 = vmul.f32 %v1139, 0.6931472
      %v1141 = vlog2.pop %v1112
      %v1142 = vmul.f32 %v1141, 0.6931472
      %v1143 = vlog2.pop %v1113
      %v1144 = vmul.f32 %v1143, 0.6931472
      %v1145 = vlog2.pop %v1114
      %v1146 = vmul.f32 %v1145, 0.6931472
      %v1147 = vadd.f32 %v1083, %v1116
      %v1148 = vadd.f32 %v1084, %v1118
      %v1149 = vadd.f32 %v1085, %v1120
      %v1150 = vadd.f32 %v1086, %v1122
      %v1151 = vadd.f32 %v1087, %v1124
      %v1152 = vadd.f32 %v1088, %v1126
      %v1153 = vadd.f32 %v1089, %v1128
      %v1154 = vadd.f32 %v1090, %v1130
      %v1155 = vadd.f32 %v1091, %v1132
      %v1156 = vadd.f32 %v1092, %v1134
      %v1157 = vadd.f32 %v1093, %v1136
      %v1158 = vadd.f32 %v1094, %v1138
      %v1159 = vadd.f32 %v1095, %v1140
      %v1160 = vadd.f32 %v1096, %v1142
      %v1161 = vadd.f32 %v1097, %v1144
      %v1162 = vadd.f32 %v1098, %v1146
      %v1163 = vlaneseq
      %v1164 = vshrl.u32 %v1163, 7
      %v1165 = vadd.s32 %v1164, 8
      %v1166 = vadd.s32 %v1164, 16
      %v1167 = vadd.s32 %v1164, 24
      %v1168 = vadd.s32 %v1164, 32
      %v1169 = vadd.s32 %v1164, 40
      %v1170 = vadd.s32 %v1164, 48
      %v1171 = vadd.s32 %v1164, 56
      %v1172 = vadd.s32 %v1164, 64
      %v1173 = vadd.s32 %v1164, 72
      %v1174 = vadd.s32 %v1164, 80
      %v1175 = vadd.s32 %v1164, 88
      %v1176 = vadd.s32 %v1164, 96
      %v1177 = vadd.s32 %v1164, 104
      %v1178 = vadd.s32 %v1164, 112
      %v1179 = vadd.s32 %v1164, 120
      %v1180 = vstv %s40
      %v1181 = vadd.s32 %v1180, %v1164
      %v1182 = vadd.s32 %v1180, %v1165
      %v1183 = vadd.s32 %v1180, %v1166
      %v1184 = vadd.s32 %v1180, %v1167
      %v1185 = vadd.s32 %v1180, %v1168
      %v1186 = vadd.s32 %v1180, %v1169
      %v1187 = vadd.s32 %v1180, %v1170
      %v1188 = vadd.s32 %v1180, %v1171
      %v1189 = vadd.s32 %v1180, %v1172
      %v1190 = vadd.s32 %v1180, %v1173
      %v1191 = vadd.s32 %v1180, %v1174
      %v1192 = vadd.s32 %v1180, %v1175
      %v1193 = vadd.s32 %v1180, %v1176
      %v1194 = vadd.s32 %v1180, %v1177
      %v1195 = vadd.s32 %v1180, %v1178
      %v1196 = vadd.s32 %v1180, %v1179
      %vm1197 = vcmp.lt.s32.totalorder %v1181, 16
      %vm1198 = vcmp.lt.s32.totalorder %v1182, 16
      %vm1199 = vcmp.lt.s32.totalorder %v1183, 16
      %vm1200 = vcmp.lt.s32.totalorder %v1184, 16
      %vm1201 = vcmp.lt.s32.totalorder %v1185, 16
      %vm1202 = vcmp.lt.s32.totalorder %v1186, 16
      %vm1203 = vcmp.lt.s32.totalorder %v1187, 16
      %vm1204 = vcmp.lt.s32.totalorder %v1188, 16
      %vm1205 = vcmp.lt.s32.totalorder %v1189, 16
      %vm1206 = vcmp.lt.s32.totalorder %v1190, 16
      %vm1207 = vcmp.lt.s32.totalorder %v1191, 16
      %vm1208 = vcmp.lt.s32.totalorder %v1192, 16
      %vm1209 = vcmp.lt.s32.totalorder %v1193, 16
      %vm1210 = vcmp.lt.s32.totalorder %v1194, 16
      %vm1211 = vcmp.lt.s32.totalorder %v1195, 16
      %vm1212 = vcmp.lt.s32.totalorder %v1196, 16
      %v1213 = vsel %vm1197, %v1147, 0.0
      %v1214 = vsel %vm1198, %v1148, 0.0
      %v1215 = vsel %vm1199, %v1149, 0.0
      %v1216 = vsel %vm1200, %v1150, 0.0
      %v1217 = vsel %vm1201, %v1151, 0.0
      %v1218 = vsel %vm1202, %v1152, 0.0
      %v1219 = vsel %vm1203, %v1153, 0.0
      %v1220 = vsel %vm1204, %v1154, 0.0
      %v1221 = vsel %vm1205, %v1155, 0.0
      %v1222 = vsel %vm1206, %v1156, 0.0
      %v1223 = vsel %vm1207, %v1157, 0.0
      %v1224 = vsel %vm1208, %v1158, 0.0
      %v1225 = vsel %vm1209, %v1159, 0.0
      %v1226 = vsel %vm1210, %v1160, 0.0
      %v1227 = vsel %vm1211, %v1161, 0.0
      %v1228 = vsel %vm1212, %v1162, 0.0
      %vm1229 = vcmask 7168
      %v1230 = vsel %vm1229, %v1213, 0.0
      %v1231 = vsel %vm1229, %v1214, 0.0
      %v1232 = vadd.f32 %v1230, %v1231
      %v1233 = vsel %vm1229, %v1215, 0.0
      %v1234 = vadd.f32 %v1232, %v1233
      %v1235 = vsel %vm1229, %v1216, 0.0
      %v1236 = vadd.f32 %v1234, %v1235
      %v1237 = vsel %vm1229, %v1217, 0.0
      %v1238 = vadd.f32 %v1236, %v1237
      %v1239 = vsel %vm1229, %v1218, 0.0
      %v1240 = vadd.f32 %v1238, %v1239
      %v1241 = vsel %vm1229, %v1219, 0.0
      %v1242 = vadd.f32 %v1240, %v1241
      %v1243 = vsel %vm1229, %v1220, 0.0
      %v1244 = vadd.f32 %v1242, %v1243
      %v1245 = vsel %vm1229, %v1221, 0.0
      %v1246 = vadd.f32 %v1244, %v1245
      %v1247 = vsel %vm1229, %v1222, 0.0
      %v1248 = vadd.f32 %v1246, %v1247
      %v1249 = vsel %vm1229, %v1223, 0.0
      %v1250 = vadd.f32 %v1248, %v1249
      %v1251 = vsel %vm1229, %v1224, 0.0
      %v1252 = vadd.f32 %v1250, %v1251
      %v1253 = vsel %vm1229, %v1225, 0.0
      %v1254 = vadd.f32 %v1252, %v1253
      %v1255 = vsel %vm1229, %v1226, 0.0
      %v1256 = vadd.f32 %v1254, %v1255
      %v1257 = vsel %vm1229, %v1227, 0.0
      %v1258 = vadd.f32 %v1256, %v1257
      %v1259 = vsel %vm1229, %v1228, 0.0
      %v1260 = vadd.f32 %v1258, %v1259
      %1261 = vadd.xlane.f32.xlu0 %v1260
      %v1262 = vpop.xlane.xlu0 %1261
      %v1263 = vrot.slane %v1262, 4
      %v1264 = vadd.f32 %v1262, %v1263
      %v1265 = vrot.slane %v1264, 2
      %v1266 = vadd.f32 %v1264, %v1265
      %v1267 = vrot.slane %v1266, 1
      %v1268 = vadd.f32 %v1266, %v1267
      %s1269 = vtos %v1268
      %v1270 = vstv %s1269
      %1271 = vst [vmem:[#allocation9] sm:$0xff] %v1270
    $region33: #{tpu_custom_call.1} parent=1 // pred_fallthru
      _
    // Predicated region
    $region34: #{tpu_custom_call.1} parent=1 // pred_check
      _
    $region35: #{tpu_custom_call.1} parent=1 // pred_check_branch
      %1273 = sbr.rel (0) target = $region37
    $region36: #{tpu_custom_call.1} parent=1 // pred_region
      %s1275 = ssub.s32 128, 128
      %1276 = vsyncadd [#allocation6], %s1275
      %s1278 = sshll.u32 [#allocation9], 4
      %s1279 = int_to_ptr.vmem [resolvable:$true] %s1278
      %1281 = dma.vmem_to_hbm [thread:$0]  %s1279, 128, %s2, [#allocation6]
    $region37: #{tpu_custom_call.1} parent=1 // pred_fallthru
      _
    // Predicated region
    $region38: #{tpu_custom_call.1} parent=1 // pred_check
      _
    $region39: #{tpu_custom_call.1} parent=1 // pred_check_branch
      %1283 = sbr.rel (0) target = $region41
    $region40: #{tpu_custom_call.1} parent=1 // pred_region
      %1284 = dma.done [#allocation6], 128
    $region41: #{tpu_custom_call.1} parent=1 // pred_fallthru
      _
    %1285 = vsyncpa [#allocation5], 1
    %1286 = vsyncpa [#allocation8], 1
    %1287 = vsyncpa [#allocation6], 1

</llo_original>
